<compile_context>
chip_gen: v7x
topology: tpu7x:2x2x1
jax: 0.10.0
libtpu: 0.0.40
codegen_flags: <defaults>
</compile_context>

<pallas_src>
import functools

import jax
import jax.numpy as jnp
from jax.experimental import pallas as pl
from jax.experimental.pallas import tpu as pltpu

BN_EPS = 1e-5


def _round_up(x, m):
    return (x + m - 1) // m * m


def _gin_kernel(eps_ref, adj_ref, hbf_ref, hrow_ref, w1_ref, w2_ref,
                g1_ref, be1_ref, g2_ref, be2_ref,
                out_ref,
                z1_buf, z2_buf, st1_ref, st2_ref, sc1_ref, sc2_ref,
                *, tm, n_real, n_tiles):
    p = pl.program_id(0)          # pass: 0 = pool+fc1, 1 = bn1+fc2, 2 = bn2+out
    t = pl.program_id(1)          # node row-tile index
    rows = pl.ds(pl.multiple_of(t * tm, tm), tm)
    inv_n = 1.0 / float(n_real)
    last = n_tiles - 1

    @pl.when((p == 0) & (t == 0))
    def _init():
        st1_ref[...] = jnp.zeros_like(st1_ref)
        st2_ref[...] = jnp.zeros_like(st2_ref)

    @pl.when(p == 0)
    def _pass0():
        # int8 0/1 -> bf16 widen (VPU), pooling on the fast bf16 MXU path with
        # f32 accumulation.
        adj_bf = adj_ref[...].astype(jnp.bfloat16)          # (tm, Npad)
        pooled = jnp.dot(adj_bf, hbf_ref[...],              # (tm, DP) f32
                         preferred_element_type=jnp.float32)
        # learn_eps reweighting in f32 (exact h row tile)
        pooled = pooled + (1.0 + eps_ref[0, 0]) * hrow_ref[...]
        # MLP hidden linear (bias dropped: no-op under training-mode BN)
        z1 = jnp.dot(pooled, w1_ref[...], preferred_element_type=jnp.float32)
        z1_buf[rows, :] = z1.astype(z1_buf.dtype)
        # padded node rows produce exactly-zero z1 (zero adj rows, zero h rows),
        # so the BN1 stats need no masking here.
        st1_ref[0:1, :] += jnp.sum(z1, axis=0, keepdims=True)
        st1_ref[1:2, :] += jnp.sum(z1 * z1, axis=0, keepdims=True)

    @pl.when(p == 1)
    def _pass1():
        @pl.when(t == 0)
        def _fold1():                                       # hoisted BN1 fold
            mean1 = st1_ref[0:1, :] * inv_n
            var1 = st1_ref[1:2, :] * inv_n - mean1 * mean1
            scale1 = g1_ref[...] * jax.lax.rsqrt(var1 + BN_EPS)
            sc1_ref[0:1, :] = scale1
            sc1_ref[1:2, :] = be1_ref[...] - mean1 * scale1

        z1 = z1_buf[rows, :].astype(jnp.float32)
        a1 = jnp.maximum(z1 * sc1_ref[0:1, :] + sc1_ref[1:2, :], 0.0)
        z2 = jnp.dot(a1, w2_ref[...], preferred_element_type=jnp.float32)
        z2_buf[rows, :] = z2.astype(z2_buf.dtype)

        def _acc2(vals):
            st2_ref[0:1, :] += jnp.sum(vals, axis=0, keepdims=True)
            st2_ref[1:2, :] += jnp.sum(vals * vals, axis=0, keepdims=True)

        if n_real % tm == 0:
            _acc2(z2)                       # no padded rows anywhere
        else:
            @pl.when(t != last)
            def _():                        # interior tiles: no mask work
                _acc2(z2)

            @pl.when(t == last)
            def _():                        # only the padded tile pays for the mask
                valid = (jax.lax.broadcasted_iota(jnp.int32, (tm, 1), 0)
                         < (n_real - last * tm))
                _acc2(jnp.where(valid, z2, 0.0))

    @pl.when(p == 2)
    def _pass2():
        @pl.when(t == 0)
        def _fold2():                                       # hoisted BN2 fold
            mean2 = st2_ref[0:1, :] * inv_n
            var2 = st2_ref[1:2, :] * inv_n - mean2 * mean2
            scale2 = g2_ref[...] * jax.lax.rsqrt(var2 + BN_EPS)
            sc2_ref[0:1, :] = scale2
            sc2_ref[1:2, :] = be2_ref[...] - mean2 * scale2

        z2 = z2_buf[rows, :].astype(jnp.float32)
        out_ref[...] = jnp.maximum(z2 * sc2_ref[0:1, :] + sc2_ref[1:2, :],
                                   0.0).astype(out_ref.dtype)


def gin_layer(adj, h, eps_scalar, params, *, tm=128):
    n, din = h.shape
    hid = params["w1"].shape[1]
    dout = params["w2"].shape[1]
    assert adj.shape == (n, n)
    # int8 adj tiles need the sublane dim divisible by 32; keep tm | 128 or 128 | tm
    assert tm % 32 == 0 and (tm % 128 == 0 or 128 % tm == 0)

    n_pad = _round_up(n, max(tm, 128))          # node-row padding (row tiles)
    dp, hp, op = (_round_up(d, 128) for d in (din, hid, dout))  # lane-dense pads
    n_tiles = n_pad // tm

    f32 = jnp.float32
    # adj entries are exactly 0/1 -> int8 storage is lossless; the O(N^2) HBM
    # stream is 1 byte/elem and widened to bf16 in-kernel.
    adj_p = jnp.zeros((n_pad, n_pad), jnp.int8).at[:n, :n].set(adj.astype(jnp.int8))
    # bf16 resident copy feeds the pooling MXU; small f32 row tiles keep the
    # (1 + eps) * h correction exact.
    h_bf = jnp.zeros((n_pad, dp), jnp.bfloat16).at[:n, :din].set(
        h.astype(jnp.bfloat16))
    h_f32 = jnp.zeros((n_pad, dp), f32).at[:n, :din].set(h.astype(f32))
    w1_p = jnp.zeros((dp, hp), f32).at[:din, :hid].set(params["w1"])
    w2_p = jnp.zeros((hp, op), f32).at[:hid, :dout].set(params["w2"])
    g1_p = jnp.ones((1, hp), f32).at[:, :hid].set(params["g1"])
    be1_p = jnp.zeros((1, hp), f32).at[:, :hid].set(params["be1"])
    g2_p = jnp.ones((1, op), f32).at[:, :dout].set(params["g2"])
    be2_p = jnp.zeros((1, op), f32).at[:, :dout].set(params["be2"])
    eps_arr = jnp.asarray(eps_scalar, f32).reshape(1, 1)
    # NOTE: params["b1"]/params["b2"] intentionally not passed: a constant bias
    # before training-mode BatchNorm is cancelled exactly by mean subtraction.

    # ---- generation-aware VMEM budgeting ---------------------------------
    def vmem_need(slab_itemsize):
        return (n_pad * (hp + op) * slab_itemsize      # z1/z2 slabs
                + 2 * tm * n_pad * 1                   # adj double buffer (int8)
                + 2 * n_pad * dp * 2                   # resident bf16 h
                + 2 * tm * dp * 4                      # f32 h row tiles
                + 2 * (dp * hp + hp * op) * 4          # w1 / w2
                + 2 * 2 * (hp + op) * 4                # gamma / beta vectors
                + 2 * tm * op * 4                      # output tiles
                + 4 * (hp + op) * 4)                   # BN stats + folded scale/shift

    try:
        phys_vmem = int(pltpu.get_tpu_info().vmem_capacity_bytes)
    except Exception:
        phys_vmem = 64 * 1024 * 1024                   # conservative (v7x per-TC)
    cap = int(phys_vmem * 0.9)
    # f32 slabs when they fit comfortably; otherwise bf16 slabs halve the
    # dominant n_pad*(hp+op) footprint (stats are accumulated from f32 values).
    slab_dtype = f32 if vmem_need(4) + (8 << 20) <= cap else jnp.bfloat16
    vmem_limit = int(min(cap, max(vmem_need(jnp.dtype(slab_dtype).itemsize)
                                  + (8 << 20), 32 << 20)))

    smem_scalar = pl.BlockSpec((1, 1), lambda p, t: (0, 0),
                               memory_space=pltpu.MemorySpace.SMEM)

    def full(shape):
        return pl.BlockSpec(shape, lambda p, t: (0, 0))

    # park on the last block after pass 0 so the pass transition issues no DMA
    row_tile_map = lambda p, t: (jnp.where(p == 0, t, n_tiles - 1), 0)

    flops = (2 * n_pad * n_pad * dp + 2 * n_pad * dp * hp + 2 * n_pad * hp * op)
    bytes_accessed = (adj_p.size * 1 + h_bf.size * 2 + h_f32.size * 4 +
                      (w1_p.size + w2_p.size) * 4 + 4 * (hp + op) * 4 +
                      n_pad * op * 4)

    out_p = pl.pallas_call(
        functools.partial(_gin_kernel, tm=tm, n_real=n, n_tiles=n_tiles),
        out_shape=jax.ShapeDtypeStruct((n_pad, op), f32),
        grid=(3, n_tiles),
        in_specs=[
            smem_scalar,                                   # eps
            pl.BlockSpec((tm, n_pad), row_tile_map),       # adj (int8, streamed pass 0)
            full((n_pad, dp)),                             # h bf16 (resident)
            pl.BlockSpec((tm, dp), row_tile_map),          # h f32 row tile (pass 0)
            full((dp, hp)), full((hp, op)),                # w1, w2
            full((1, hp)), full((1, hp)),                  # g1, be1
            full((1, op)), full((1, op)),                  # g2, be2
        ],
        out_specs=pl.BlockSpec((tm, op),
                               lambda p, t: (jnp.where(p == 2, t, 0), 0)),
        scratch_shapes=[
            pltpu.VMEM((n_pad, hp), slab_dtype),   # z1 slab (stays on-chip)
            pltpu.VMEM((n_pad, op), slab_dtype),   # z2 slab
            pltpu.VMEM((2, hp), f32),              # BN1 [sum; sum_sq]
            pltpu.VMEM((2, op), f32),              # BN2 [sum; sum_sq]
            pltpu.VMEM((2, hp), f32),              # BN1 folded [scale; shift]
            pltpu.VMEM((2, op), f32),              # BN2 folded [scale; shift]
        ],
        compiler_params=pltpu.CompilerParams(
            # Both axes carry sequential reductions (shared BN accumulators and
            # the pass -> pass dependency), so both stay 'arbitrary'.
            dimension_semantics=("arbitrary", "arbitrary"),
            vmem_limit_bytes=vmem_limit,
        ),
        cost_estimate=pl.CostEstimate(
            flops=flops,
            transcendentals=hp + op,
            bytes_accessed=bytes_accessed),
    )(eps_arr, adj_p, h_bf, h_f32, w1_p, w2_p, g1_p, be1_p, g2_p, be2_p)

    return out_p[:n, :dout]


def gin_layer_ref(adj, h, eps_scalar, params, *, bf16_pool=False):
    """Pure-JAX reference matching the PyTorch forward (biases included).

    bf16_pool=True mirrors the kernel's bf16 pooling matmul (adj and h rounded
    to bf16, f32 accumulation); everything else stays f32.
    """
    if bf16_pool:
        nbr = jnp.dot(adj.astype(jnp.bfloat16), h.astype(jnp.bfloat16),
                      preferred_element_type=jnp.float32)
    else:
        nbr = adj @ h
    pooled = nbr + (1.0 + eps_scalar) * h

    def lbr(x, w, b, g, be):
        z = x @ w + b
        m = jnp.mean(z, axis=0, keepdims=True)
        v = jnp.mean((z - m) ** 2, axis=0, keepdims=True)
        return jnp.maximum((z - m) / jnp.sqrt(v + BN_EPS) * g + be, 0.0)

    a1 = lbr(pooled, params["w1"], params["b1"], params["g1"], params["be1"])
    return lbr(a1, params["w2"], params["b2"], params["g2"], params["be2"])


if __name__ == "__main__":
    # Small synthetic graph / model sizes (N deliberately not a tile multiple).
    N = 100         # number of nodes (the "batch" for BatchNorm1d)
    DIN = 16        # input feature dim
    HID = 32        # MLP hidden dim
    DOUT = 32       # mlp.output_dim
    NUM_LAYERS = 3  # size of learnable eps vector
    LAYER = 0       # self.layer index into eps

    key = jax.random.PRNGKey(0)
    k_adj, k_h, k_w1, k_b1, k_w2, k_b2, k_eps = jax.random.split(key, 7)

    # Deterministic dense adjacency (directed edges j -> i), ~20% density
    adj = (jax.random.uniform(k_adj, (N, N)) < 0.2).astype(jnp.float32)
    h = jax.random.normal(k_h, (N, DIN), dtype=jnp.float32)

    s1 = 1.0 / jnp.sqrt(DIN)
    s2 = 1.0 / jnp.sqrt(HID)
    params = {
        "w1": jax.random.uniform(k_w1, (DIN, HID), minval=-s1, maxval=s1),
        "b1": jax.random.uniform(k_b1, (1, HID), minval=-s1, maxval=s1),
        "g1": jnp.ones((1, HID), jnp.float32),
        "be1": jnp.zeros((1, HID), jnp.float32),
        "w2": jax.random.uniform(k_w2, (HID, DOUT), minval=-s2, maxval=s2),
        "b2": jax.random.uniform(k_b2, (1, DOUT), minval=-s2, maxval=s2),
        "g2": jnp.ones((1, DOUT), jnp.float32),
        "be2": jnp.zeros((1, DOUT), jnp.float32),
    }
    # learnable eps vector (learn_eps=True), take eps[self.layer]
    eps_vec = 0.1 * jax.random.normal(k_eps, (NUM_LAYERS,), dtype=jnp.float32)
    eps_scalar = eps_vec[LAYER]

    out = gin_layer(adj, h, eps_scalar, params, tm=128)
    out = jax.block_until_ready(out)
    assert out.shape == (N, DOUT) and out.dtype == jnp.float32

    # Tight check against a reference that mirrors the kernel's bf16 pooling
    # matmul (same quantization, f32 accumulation): validates everything except
    # the intentional bf16 rounding of h inside the neighbor sum.
    ref_bf = gin_layer_ref(adj, h, eps_scalar, params, bf16_pool=True)
    assert jnp.allclose(out, ref_bf, atol=2e-3, rtol=2e-3), \
        float(jnp.max(jnp.abs(out - ref_bf)))

    # Looser check against the full-f32 reference; the gap is the bf16 pooling
    # matmul requested by the performance review (f32 accumulation keeps it small).
    ref = gin_layer_ref(adj, h, eps_scalar, params)
    assert jnp.allclose(out, ref, atol=3e-2, rtol=3e-2), \
        float(jnp.max(jnp.abs(out - ref)))

    print("KERNEL_OK")
</pallas_src>

<mosaic_0001>
module attributes {stable_mosaic.version = 11 : i64} {
  func.func @_gin_kernel(%arg0: i32, %arg1: i32, %arg2: memref<1x1xf32, #tpu.memory_space<smem>>, %arg3: memref<128x128xi8, #tpu.memory_space<vmem>>, %arg4: memref<128x128xbf16, #tpu.memory_space<vmem>>, %arg5: memref<128x128xf32, #tpu.memory_space<vmem>>, %arg6: memref<128x128xf32, #tpu.memory_space<vmem>>, %arg7: memref<128x128xf32, #tpu.memory_space<vmem>>, %arg8: memref<1x128xf32, #tpu.memory_space<vmem>>, %arg9: memref<1x128xf32, #tpu.memory_space<vmem>>, %arg10: memref<1x128xf32, #tpu.memory_space<vmem>>, %arg11: memref<1x128xf32, #tpu.memory_space<vmem>>, %arg12: memref<128x128xf32, #tpu.memory_space<vmem>>, %arg13: memref<128x128xf32, #tpu.memory_space<vmem>>, %arg14: memref<128x128xf32, #tpu.memory_space<vmem>>, %arg15: memref<2x128xf32, #tpu.memory_space<vmem>>, %arg16: memref<2x128xf32, #tpu.memory_space<vmem>>, %arg17: memref<2x128xf32, #tpu.memory_space<vmem>>, %arg18: memref<2x128xf32, #tpu.memory_space<vmem>>) attributes {dimension_semantics = [#tpu.dimension_semantics<arbitrary>, #tpu.dimension_semantics<arbitrary>], iteration_bounds = array<i64: 3, 1>, scalar_prefetch = 0 : i64, scratch_operands = 6 : i64, tpu.core_type = #tpu.core_type<tc>, window_params = [{transform_indices = @transform_0, window_bounds = array<i64: 1, 1>}, {transform_indices = @transform_1, window_bounds = array<i64: 128, 128>}, {pipeline_mode = #tpu.pipeline_mode<synchronous>, transform_indices = @transform_2, window_bounds = array<i64: 128, 128>}, {transform_indices = @transform_3, window_bounds = array<i64: 128, 128>}, {pipeline_mode = #tpu.pipeline_mode<synchronous>, transform_indices = @transform_4, window_bounds = array<i64: 128, 128>}, {pipeline_mode = #tpu.pipeline_mode<synchronous>, transform_indices = @transform_5, window_bounds = array<i64: 128, 128>}, {pipeline_mode = #tpu.pipeline_mode<synchronous>, transform_indices = @transform_6, window_bounds = array<i64: 1, 128>}, {pipeline_mode = #tpu.pipeline_mode<synchronous>, transform_indices = @transform_7, window_bounds = array<i64: 1, 128>}, {pipeline_mode = #tpu.pipeline_mode<synchronous>, transform_indices = @transform_8, window_bounds = array<i64: 1, 128>}, {pipeline_mode = #tpu.pipeline_mode<synchronous>, transform_indices = @transform_9, window_bounds = array<i64: 1, 128>}, {transform_indices = @transform_10, window_bounds = array<i64: 128, 128>}]} {
    %c128_i32 = arith.constant 128 : i32
    %0 = arith.muli %arg1, %c128_i32 : i32
    %1 = tpu.assume_multiple %0, 128 : i32
    %c0_i32 = arith.constant 0 : i32
    %2 = arith.cmpi eq, %arg0, %c0_i32 : i32
    %c0_i32_0 = arith.constant 0 : i32
    %3 = arith.cmpi eq, %arg1, %c0_i32_0 : i32
    %4 = arith.andi %2, %3 : i1
    %5 = arith.extui %4 : i1 to i32
    %c0_i32_1 = arith.constant 0 : i32
    %6 = arith.cmpi ne, %5, %c0_i32_1 : i32
    scf.if %6 {
      %cst = arith.constant 0.000000e+00 : f32
      %16 = vector.broadcast %cst : f32 to vector<2x128xf32>
      %c0 = arith.constant 0 : index
      %c0_6 = arith.constant 0 : index
      %17 = vector.load %arg15[%c0, %c0_6] : memref<2x128xf32, #tpu.memory_space<vmem>>, vector<2x128xf32>
      tpu.vector_store %arg15[%c0, %c0_6], %16 {strides = array<i32>} : memref<2x128xf32, #tpu.memory_space<vmem>>, vector<2x128xf32>,
      %cst_7 = arith.constant 0.000000e+00 : f32
      %18 = vector.broadcast %cst_7 : f32 to vector<2x128xf32>
      %c0_8 = arith.constant 0 : index
      %c0_9 = arith.constant 0 : index
      %19 = vector.load %arg16[%c0_8, %c0_9] : memref<2x128xf32, #tpu.memory_space<vmem>>, vector<2x128xf32>
      tpu.vector_store %arg16[%c0_8, %c0_9], %18 {strides = array<i32>} : memref<2x128xf32, #tpu.memory_space<vmem>>, vector<2x128xf32>,
    } else {
    }
    %c0_i32_2 = arith.constant 0 : i32
    %7 = arith.cmpi eq, %arg0, %c0_i32_2 : i32
    %8 = arith.extui %7 : i1 to i32
    %c0_i32_3 = arith.constant 0 : i32
    %9 = arith.cmpi ne, %8, %c0_i32_3 : i32
    scf.if %9 {
      %c0 = arith.constant 0 : index
      %c0_6 = arith.constant 0 : index
      %16 = vector.load %arg3[%c0, %c0_6] : memref<128x128xi8, #tpu.memory_space<vmem>>, vector<128x128xi8>
      %17 = arith.sitofp %16 : vector<128x128xi8> to vector<128x128xbf16>
      %c0_7 = arith.constant 0 : index
      %c0_8 = arith.constant 0 : index
      %18 = vector.load %arg4[%c0_7, %c0_8] : memref<128x128xbf16, #tpu.memory_space<vmem>>, vector<128x128xbf16>
      %cst = arith.constant dense<0.000000e+00> : vector<128x128xf32>
      %19 = tpu.matmul %17, %18, %cst {dimension_numbers = #tpu.dot_dimension_numbers<[1], [0], [0], [1], [0, 0, 1, 1], [], []>} : vector<128x128xbf16>, vector<128x128xbf16>, vector<128x128xf32> -> vector<128x128xf32>
      %c0_9 = arith.constant 0 : index
      %c0_10 = arith.constant 0 : index
      %20 = memref.load %arg2[%c0_9, %c0_10] : memref<1x1xf32, #tpu.memory_space<smem>>
      %cst_11 = arith.constant 1.000000e+00 : f32
      %21 = arith.addf %cst_11, %20 : f32
      %c0_12 = arith.constant 0 : index
      %c0_13 = arith.constant 0 : index
      %22 = vector.load %arg5[%c0_12, %c0_13] : memref<128x128xf32, #tpu.memory_space<vmem>>, vector<128x128xf32>
      %23 = vector.broadcast %21 : f32 to vector<128x128xf32>
      %24 = arith.mulf %23, %22 : vector<128x128xf32>
      %25 = arith.addf %19, %24 : vector<128x128xf32>
      %c0_14 = arith.constant 0 : index
      %c0_15 = arith.constant 0 : index
      %26 = vector.load %arg6[%c0_14, %c0_15] : memref<128x128xf32, #tpu.memory_space<vmem>>, vector<128x128xf32>
      %cst_16 = arith.constant dense<0.000000e+00> : vector<128x128xf32>
      %27 = tpu.matmul %25, %26, %cst_16 {dimension_numbers = #tpu.dot_dimension_numbers<[1], [0], [0], [1], [0, 0, 1, 1], [], []>} : vector<128x128xf32>, vector<128x128xf32>, vector<128x128xf32> -> vector<128x128xf32>
      %28 = arith.index_cast %1 : i32 to index
      %c0_17 = arith.constant 0 : index
      %29 = vector.load %arg13[%28, %c0_17] : memref<128x128xf32, #tpu.memory_space<vmem>>, vector<128x128xf32>
      tpu.vector_store %arg13[%28, %c0_17], %27 {strides = array<i32>} : memref<128x128xf32, #tpu.memory_space<vmem>>, vector<128x128xf32>,
      %c0_18 = arith.constant 0 : index
      %c0_19 = arith.constant 0 : index
      %30 = vector.load %arg15[%c0_18, %c0_19] : memref<2x128xf32, #tpu.memory_space<vmem>>, vector<1x128xf32>
      %cst_20 = arith.constant dense<0.000000e+00> : vector<128xf32>
      %31 = vector.multi_reduction <add>, %27, %cst_20 [0] : vector<128x128xf32> to vector<128xf32>
      %32 = vector.shape_cast %31 : vector<128xf32> to vector<1x128xf32>
      %33 = arith.addf %30, %32 : vector<1x128xf32>
      %c0_21 = arith.constant 0 : index
      %c0_22 = arith.constant 0 : index
      %34 = vector.load %arg15[%c0_21, %c0_22] : memref<2x128xf32, #tpu.memory_space<vmem>>, vector<1x128xf32>
      tpu.vector_store %arg15[%c0_21, %c0_22], %33 {strides = array<i32>} : memref<2x128xf32, #tpu.memory_space<vmem>>, vector<1x128xf32>,
      %c1 = arith.constant 1 : index
      %c0_23 = arith.constant 0 : index
      %35 = vector.load %arg15[%c1, %c0_23] : memref<2x128xf32, #tpu.memory_space<vmem>>, vector<1x128xf32>
      %36 = arith.mulf %27, %27 : vector<128x128xf32>
      %cst_24 = arith.constant dense<0.000000e+00> : vector<128xf32>
      %37 = vector.multi_reduction <add>, %36, %cst_24 [0] : vector<128x128xf32> to vector<128xf32>
      %38 = vector.shape_cast %37 : vector<128xf32> to vector<1x128xf32>
      %39 = arith.addf %35, %38 : vector<1x128xf32>
      %c1_25 = arith.constant 1 : index
      %c0_26 = arith.constant 0 : index
      %40 = vector.load %arg15[%c1_25, %c0_26] : memref<2x128xf32, #tpu.memory_space<vmem>>, vector<1x128xf32>
      tpu.vector_store %arg15[%c1_25, %c0_26], %39 {strides = array<i32>} : memref<2x128xf32, #tpu.memory_space<vmem>>, vector<1x128xf32>,
    } else {
    }
    %c1_i32 = arith.constant 1 : i32
    %10 = arith.cmpi eq, %arg0, %c1_i32 : i32
    %11 = arith.extui %10 : i1 to i32
    %c0_i32_4 = arith.constant 0 : i32
    %12 = arith.cmpi ne, %11, %c0_i32_4 : i32
    scf.if %12 {
      %c0_i32_6 = arith.constant 0 : i32
      %16 = arith.cmpi eq, %arg1, %c0_i32_6 : i32
      %17 = arith.extui %16 : i1 to i32
      %c0_i32_7 = arith.constant 0 : i32
      %18 = arith.cmpi ne, %17, %c0_i32_7 : i32
      scf.if %18 {
        %c0_19 = arith.constant 0 : index
        %c0_20 = arith.constant 0 : index
        %39 = vector.load %arg15[%c0_19, %c0_20] : memref<2x128xf32, #tpu.memory_space<vmem>>, vector<1x128xf32>
        %cst_21 = arith.constant 0.00999999977 : f32
        %40 = vector.broadcast %cst_21 : f32 to vector<1x128xf32>
        %41 = arith.mulf %39, %40 : vector<1x128xf32>
        %c1_22 = arith.constant 1 : index
        %c0_23 = arith.constant 0 : index
        %42 = vector.load %arg15[%c1_22, %c0_23] : memref<2x128xf32, #tpu.memory_space<vmem>>, vector<1x128xf32>
        %cst_24 = arith.constant 0.00999999977 : f32
        %43 = vector.broadcast %cst_24 : f32 to vector<1x128xf32>
        %44 = arith.mulf %42, %43 : vector<1x128xf32>
        %45 = arith.mulf %41, %41 : vector<1x128xf32>
        %46 = arith.subf %44, %45 : vector<1x128xf32>
        %c0_25 = arith.constant 0 : index
        %c0_26 = arith.constant 0 : index
        %47 = vector.load %arg8[%c0_25, %c0_26] : memref<1x128xf32, #tpu.memory_space<vmem>>, vector<1x128xf32>
        %cst_27 = arith.constant 9.99999974E-6 : f32
        %48 = vector.broadcast %cst_27 : f32 to vector<1x128xf32>
        %49 = arith.addf %46, %48 : vector<1x128xf32>
        %50 = math.rsqrt %49 : vector<1x128xf32>
        %51 = arith.mulf %47, %50 : vector<1x128xf32>
        %c0_28 = arith.constant 0 : index
        %c0_29 = arith.constant 0 : index
        %52 = vector.load %arg17[%c0_28, %c0_29] : memref<2x128xf32, #tpu.memory_space<vmem>>, vector<1x128xf32>
        tpu.vector_store %arg17[%c0_28, %c0_29], %51 {strides = array<i32>} : memref<2x128xf32, #tpu.memory_space<vmem>>, vector<1x128xf32>,
        %c0_30 = arith.constant 0 : index
        %c0_31 = arith.constant 0 : index
        %53 = vector.load %arg9[%c0_30, %c0_31] : memref<1x128xf32, #tpu.memory_space<vmem>>, vector<1x128xf32>
        %54 = arith.mulf %41, %51 : vector<1x128xf32>
        %55 = arith.subf %53, %54 : vector<1x128xf32>
        %c1_32 = arith.constant 1 : index
        %c0_33 = arith.constant 0 : index
        %56 = vector.load %arg17[%c1_32, %c0_33] : memref<2x128xf32, #tpu.memory_space<vmem>>, vector<1x128xf32>
        tpu.vector_store %arg17[%c1_32, %c0_33], %55 {strides = array<i32>} : memref<2x128xf32, #tpu.memory_space<vmem>>, vector<1x128xf32>,
      } else {
      }
      %19 = arith.index_cast %1 : i32 to index
      %c0 = arith.constant 0 : index
      %20 = vector.load %arg13[%19, %c0] : memref<128x128xf32, #tpu.memory_space<vmem>>, vector<128x128xf32>
      %c0_8 = arith.constant 0 : index
      %c0_9 = arith.constant 0 : index
      %21 = vector.load %arg17[%c0_8, %c0_9] : memref<2x128xf32, #tpu.memory_space<vmem>>, vector<1x128xf32>
      %22 = vector.broadcast %21 : vector<1x128xf32> to vector<128x128xf32>
      %23 = arith.mulf %20, %22 : vector<128x128xf32>
      %c1 = arith.constant 1 : index
      %c0_10 = arith.constant 0 : index
      %24 = vector.load %arg17[%c1, %c0_10] : memref<2x128xf32, #tpu.memory_space<vmem>>, vector<1x128xf32>
      %25 = vector.broadcast %24 : vector<1x128xf32> to vector<128x128xf32>
      %26 = arith.addf %23, %25 : vector<128x128xf32>
      %cst = arith.constant 0.000000e+00 : f32
      %27 = vector.broadcast %cst : f32 to vector<128x128xf32>
      %28 = arith.maximumf %26, %27 : vector<128x128xf32>
      %c0_11 = arith.constant 0 : index
      %c0_12 = arith.constant 0 : index
      %29 = vector.load %arg7[%c0_11, %c0_12] : memref<128x128xf32, #tpu.memory_space<vmem>>, vector<128x128xf32>
      %cst_13 = arith.constant dense<0.000000e+00> : vector<128x128xf32>
      %30 = tpu.matmul %28, %29, %cst_13 {dimension_numbers = #tpu.dot_dimension_numbers<[1], [0], [0], [1], [0, 0, 1, 1], [], []>} : vector<128x128xf32>, vector<128x128xf32>, vector<128x128xf32> -> vector<128x128xf32>
      %31 = arith.index_cast %1 : i32 to index
      %c0_14 = arith.constant 0 : index
      %32 = vector.load %arg14[%31, %c0_14] : memref<128x128xf32, #tpu.memory_space<vmem>>, vector<128x128xf32>
      tpu.vector_store %arg14[%31, %c0_14], %30 {strides = array<i32>} : memref<128x128xf32, #tpu.memory_space<vmem>>, vector<128x128xf32>,
      %c0_i32_15 = arith.constant 0 : i32
      %33 = arith.cmpi ne, %arg1, %c0_i32_15 : i32
      %34 = arith.extui %33 : i1 to i32
      %c0_i32_16 = arith.constant 0 : i32
      %35 = arith.cmpi ne, %34, %c0_i32_16 : i32
      scf.if %35 {
        %c0_19 = arith.constant 0 : index
        %c0_20 = arith.constant 0 : index
        %39 = vector.load %arg16[%c0_19, %c0_20] : memref<2x128xf32, #tpu.memory_space<vmem>>, vector<1x128xf32>
        %cst_21 = arith.constant dense<0.000000e+00> : vector<128xf32>
        %40 = vector.multi_reduction <add>, %30, %cst_21 [0] : vector<128x128xf32> to vector<128xf32>
        %41 = vector.shape_cast %40 : vector<128xf32> to vector<1x128xf32>
        %42 = arith.addf %39, %41 : vector<1x128xf32>
        %c0_22 = arith.constant 0 : index
        %c0_23 = arith.constant 0 : index
        %43 = vector.load %arg16[%c0_22, %c0_23] : memref<2x128xf32, #tpu.memory_space<vmem>>, vector<1x128xf32>
        tpu.vector_store %arg16[%c0_22, %c0_23], %42 {strides = array<i32>} : memref<2x128xf32, #tpu.memory_space<vmem>>, vector<1x128xf32>,
        %c1_24 = arith.constant 1 : index
        %c0_25 = arith.constant 0 : index
        %44 = vector.load %arg16[%c1_24, %c0_25] : memref<2x128xf32, #tpu.memory_space<vmem>>, vector<1x128xf32>
        %45 = arith.mulf %30, %30 : vector<128x128xf32>
        %cst_26 = arith.constant dense<0.000000e+00> : vector<128xf32>
        %46 = vector.multi_reduction <add>, %45, %cst_26 [0] : vector<128x128xf32> to vector<128xf32>
        %47 = vector.shape_cast %46 : vector<128xf32> to vector<1x128xf32>
        %48 = arith.addf %44, %47 : vector<1x128xf32>
        %c1_27 = arith.constant 1 : index
        %c0_28 = arith.constant 0 : index
        %49 = vector.load %arg16[%c1_27, %c0_28] : memref<2x128xf32, #tpu.memory_space<vmem>>, vector<1x128xf32>
        tpu.vector_store %arg16[%c1_27, %c0_28], %48 {strides = array<i32>} : memref<2x128xf32, #tpu.memory_space<vmem>>, vector<1x128xf32>,
      } else {
      }
      %c0_i32_17 = arith.constant 0 : i32
      %36 = arith.cmpi eq, %arg1, %c0_i32_17 : i32
      %37 = arith.extui %36 : i1 to i32
      %c0_i32_18 = arith.constant 0 : i32
      %38 = arith.cmpi ne, %37, %c0_i32_18 : i32
      scf.if %38 {
        %39 = tpu.iota {dimensions = array<i32: 0>} : vector<128x1xi32>
        %c100_i32 = arith.constant 100 : i32
        %40 = vector.broadcast %c100_i32 : i32 to vector<128x1xi32>
        %41 = arith.cmpi slt, %39, %40 : vector<128x1xi32>
        %cst_19 = arith.constant 0.000000e+00 : f32
        %42 = vector.shape_cast %41 : vector<128x1xi1> to vector<128x1xi1>
        %43 = vector.broadcast %42 : vector<128x1xi1> to vector<128x128xi1>
        %44 = vector.broadcast %cst_19 : f32 to vector<128x128xf32>
        %45 = arith.select %43, %30, %44 : vector<128x128xi1>, vector<128x128xf32>
        %c0_20 = arith.constant 0 : index
        %c0_21 = arith.constant 0 : index
        %46 = vector.load %arg16[%c0_20, %c0_21] : memref<2x128xf32, #tpu.memory_space<vmem>>, vector<1x128xf32>
        %cst_22 = arith.constant dense<0.000000e+00> : vector<128xf32>
        %47 = vector.multi_reduction <add>, %45, %cst_22 [0] : vector<128x128xf32> to vector<128xf32>
        %48 = vector.shape_cast %47 : vector<128xf32> to vector<1x128xf32>
        %49 = arith.addf %46, %48 : vector<1x128xf32>
        %c0_23 = arith.constant 0 : index
        %c0_24 = arith.constant 0 : index
        %50 = vector.load %arg16[%c0_23, %c0_24] : memref<2x128xf32, #tpu.memory_space<vmem>>, vector<1x128xf32>
        tpu.vector_store %arg16[%c0_23, %c0_24], %49 {strides = array<i32>} : memref<2x128xf32, #tpu.memory_space<vmem>>, vector<1x128xf32>,
        %c1_25 = arith.constant 1 : index
        %c0_26 = arith.constant 0 : index
        %51 = vector.load %arg16[%c1_25, %c0_26] : memref<2x128xf32, #tpu.memory_space<vmem>>, vector<1x128xf32>
        %52 = arith.mulf %45, %45 : vector<128x128xf32>
        %cst_27 = arith.constant dense<0.000000e+00> : vector<128xf32>
        %53 = vector.multi_reduction <add>, %52, %cst_27 [0] : vector<128x128xf32> to vector<128xf32>
        %54 = vector.shape_cast %53 : vector<128xf32> to vector<1x128xf32>
        %55 = arith.addf %51, %54 : vector<1x128xf32>
        %c1_28 = arith.constant 1 : index
        %c0_29 = arith.constant 0 : index
        %56 = vector.load %arg16[%c1_28, %c0_29] : memref<2x128xf32, #tpu.memory_space<vmem>>, vector<1x128xf32>
        tpu.vector_store %arg16[%c1_28, %c0_29], %55 {strides = array<i32>} : memref<2x128xf32, #tpu.memory_space<vmem>>, vector<1x128xf32>,
      } else {
      }
    } else {
    }
    %c2_i32 = arith.constant 2 : i32
    %13 = arith.cmpi eq, %arg0, %c2_i32 : i32
    %14 = arith.extui %13 : i1 to i32
    %c0_i32_5 = arith.constant 0 : i32
    %15 = arith.cmpi ne, %14, %c0_i32_5 : i32
    scf.if %15 {
      %c0_i32_6 = arith.constant 0 : i32
      %16 = arith.cmpi eq, %arg1, %c0_i32_6 : i32
      %17 = arith.extui %16 : i1 to i32
      %c0_i32_7 = arith.constant 0 : i32
      %18 = arith.cmpi ne, %17, %c0_i32_7 : i32
      scf.if %18 {
        %c0_13 = arith.constant 0 : index
        %c0_14 = arith.constant 0 : index
        %30 = vector.load %arg16[%c0_13, %c0_14] : memref<2x128xf32, #tpu.memory_space<vmem>>, vector<1x128xf32>
        %cst_15 = arith.constant 0.00999999977 : f32
        %31 = vector.broadcast %cst_15 : f32 to vector<1x128xf32>
        %32 = arith.mulf %30, %31 : vector<1x128xf32>
        %c1_16 = arith.constant 1 : index
        %c0_17 = arith.constant 0 : index
        %33 = vector.load %arg16[%c1_16, %c0_17] : memref<2x128xf32, #tpu.memory_space<vmem>>, vector<1x128xf32>
        %cst_18 = arith.constant 0.00999999977 : f32
        %34 = vector.broadcast %cst_18 : f32 to vector<1x128xf32>
        %35 = arith.mulf %33, %34 : vector<1x128xf32>
        %36 = arith.mulf %32, %32 : vector<1x128xf32>
        %37 = arith.subf %35, %36 : vector<1x128xf32>
        %c0_19 = arith.constant 0 : index
        %c0_20 = arith.constant 0 : index
        %38 = vector.load %arg10[%c0_19, %c0_20] : memref<1x128xf32, #tpu.memory_space<vmem>>, vector<1x128xf32>
        %cst_21 = arith.constant 9.99999974E-6 : f32
        %39 = vector.broadcast %cst_21 : f32 to vector<1x128xf32>
        %40 = arith.addf %37, %39 : vector<1x128xf32>
        %41 = math.rsqrt %40 : vector<1x128xf32>
        %42 = arith.mulf %38, %41 : vector<1x128xf32>
        %c0_22 = arith.constant 0 : index
        %c0_23 = arith.constant 0 : index
        %43 = vector.load %arg18[%c0_22, %c0_23] : memref<2x128xf32, #tpu.memory_space<vmem>>, vector<1x128xf32>
        tpu.vector_store %arg18[%c0_22, %c0_23], %42 {strides = array<i32>} : memref<2x128xf32, #tpu.memory_space<vmem>>, vector<1x128xf32>,
        %c0_24 = arith.constant 0 : index
        %c0_25 = arith.constant 0 : index
        %44 = vector.load %arg11[%c0_24, %c0_25] : memref<1x128xf32, #tpu.memory_space<vmem>>, vector<1x128xf32>
        %45 = arith.mulf %32, %42 : vector<1x128xf32>
        %46 = arith.subf %44, %45 : vector<1x128xf32>
        %c1_26 = arith.constant 1 : index
        %c0_27 = arith.constant 0 : index
        %47 = vector.load %arg18[%c1_26, %c0_27] : memref<2x128xf32, #tpu.memory_space<vmem>>, vector<1x128xf32>
        tpu.vector_store %arg18[%c1_26, %c0_27], %46 {strides = array<i32>} : memref<2x128xf32, #tpu.memory_space<vmem>>, vector<1x128xf32>,
      } else {
      }
      %19 = arith.index_cast %1 : i32 to index
      %c0 = arith.constant 0 : index
      %20 = vector.load %arg14[%19, %c0] : memref<128x128xf32, #tpu.memory_space<vmem>>, vector<128x128xf32>
      %c0_8 = arith.constant 0 : index
      %c0_9 = arith.constant 0 : index
      %21 = vector.load %arg18[%c0_8, %c0_9] : memref<2x128xf32, #tpu.memory_space<vmem>>, vector<1x128xf32>
      %22 = vector.broadcast %21 : vector<1x128xf32> to vector<128x128xf32>
      %23 = arith.mulf %20, %22 : vector<128x128xf32>
      %c1 = arith.constant 1 : index
      %c0_10 = arith.constant 0 : index
      %24 = vector.load %arg18[%c1, %c0_10] : memref<2x128xf32, #tpu.memory_space<vmem>>, vector<1x128xf32>
      %25 = vector.broadcast %24 : vector<1x128xf32> to vector<128x128xf32>
      %26 = arith.addf %23, %25 : vector<128x128xf32>
      %cst = arith.constant 0.000000e+00 : f32
      %27 = vector.broadcast %cst : f32 to vector<128x128xf32>
      %28 = arith.maximumf %26, %27 : vector<128x128xf32>
      %c0_11 = arith.constant 0 : index
      %c0_12 = arith.constant 0 : index
      %29 = vector.load %arg12[%c0_11, %c0_12] : memref<128x128xf32, #tpu.memory_space<vmem>>, vector<128x128xf32>
      tpu.vector_store %arg12[%c0_11, %c0_12], %28 {strides = array<i32>} : memref<128x128xf32, #tpu.memory_space<vmem>>, vector<128x128xf32>,
    } else {
    }
    return
  }
  func.func @transform_0(%arg0: i32, %arg1: i32) -> (i32, i32) {
    %c0_i32 = arith.constant 0 : i32
    %c0_i32_0 = arith.constant 0 : i32
    %c0_i32_1 = arith.constant 0 : i32
    return %c0_i32, %c0_i32_0 : i32, i32
  }
  func.func @transform_1(%arg0: i32, %arg1: i32) -> (i32, i32) {
    %c0_i32 = arith.constant 0 : i32
    %0 = arith.cmpi eq, %arg0, %c0_i32 : i32
    %c0_i32_0 = arith.constant 0 : i32
    %1 = arith.select %0, %arg1, %c0_i32_0 : i32
    %c0_i32_1 = arith.constant 0 : i32
    %c0_i32_2 = arith.constant 0 : i32
    return %1, %c0_i32_1 : i32, i32
  }
  func.func @transform_2(%arg0: i32, %arg1: i32) -> (i32, i32) {
    %c0_i32 = arith.constant 0 : i32
    %c0_i32_0 = arith.constant 0 : i32
    %c0_i32_1 = arith.constant 0 : i32
    return %c0_i32, %c0_i32_0 : i32, i32
  }
  func.func @transform_3(%arg0: i32, %arg1: i32) -> (i32, i32) {
    %c0_i32 = arith.constant 0 : i32
    %0 = arith.cmpi eq, %arg0, %c0_i32 : i32
    %c0_i32_0 = arith.constant 0 : i32
    %1 = arith.select %0, %arg1, %c0_i32_0 : i32
    %c0_i32_1 = arith.constant 0 : i32
    %c0_i32_2 = arith.constant 0 : i32
    return %1, %c0_i32_1 : i32, i32
  }
  func.func @transform_4(%arg0: i32, %arg1: i32) -> (i32, i32) {
    %c0_i32 = arith.constant 0 : i32
    %c0_i32_0 = arith.constant 0 : i32
    %c0_i32_1 = arith.constant 0 : i32
    return %c0_i32, %c0_i32_0 : i32, i32
  }
  func.func @transform_5(%arg0: i32, %arg1: i32) -> (i32, i32) {
    %c0_i32 = arith.constant 0 : i32
    %c0_i32_0 = arith.constant 0 : i32
    %c0_i32_1 = arith.constant 0 : i32
    return %c0_i32, %c0_i32_0 : i32, i32
  }
  func.func @transform_6(%arg0: i32, %arg1: i32) -> (i32, i32) {
    %c0_i32 = arith.constant 0 : i32
    %c0_i32_0 = arith.constant 0 : i32
    %c0_i32_1 = arith.constant 0 : i32
    return %c0_i32, %c0_i32_0 : i32, i32
  }
  func.func @transform_7(%arg0: i32, %arg1: i32) -> (i32, i32) {
    %c0_i32 = arith.constant 0 : i32
    %c0_i32_0 = arith.constant 0 : i32
    %c0_i32_1 = arith.constant 0 : i32
    return %c0_i32, %c0_i32_0 : i32, i32
  }
  func.func @transform_8(%arg0: i32, %arg1: i32) -> (i32, i32) {
    %c0_i32 = arith.constant 0 : i32
    %c0_i32_0 = arith.constant 0 : i32
    %c0_i32_1 = arith.constant 0 : i32
    return %c0_i32, %c0_i32_0 : i32, i32
  }
  func.func @transform_9(%arg0: i32, %arg1: i32) -> (i32, i32) {
    %c0_i32 = arith.constant 0 : i32
    %c0_i32_0 = arith.constant 0 : i32
    %c0_i32_1 = arith.constant 0 : i32
    return %c0_i32, %c0_i32_0 : i32, i32
  }
  func.func @transform_10(%arg0: i32, %arg1: i32) -> (i32, i32) {
    %c2_i32 = arith.constant 2 : i32
    %0 = arith.cmpi eq, %arg0, %c2_i32 : i32
    %c0_i32 = arith.constant 0 : i32
    %1 = arith.select %0, %arg1, %c0_i32 : i32
    %c0_i32_0 = arith.constant 0 : i32
    %c0_i32_1 = arith.constant 0 : i32
    return %1, %c0_i32_0 : i32, i32
  }
}

</mosaic_0001>

<llo_original>
// kernel: tpu_custom_call.1
$region0: #{tpu_custom_call.1}
  #allocation0 [shape = 'u32[]', space=smem, size = 0x4, offset = 0x4, fixed_abs, tag = 'smem constant byte address 0x4 - core index']
  #allocation1 [shape = 'u32[144,128]{1,0:T(1,128)}', space=vmem, size = 0x12000, scoped, tag = 'internal scratch']
  #allocation2 [shape = 'f32[128,128]{1,0:T(8,128)}', space=vmem, size = 0x10000, scoped, tag = 'scratch operand']
  #allocation3 [shape = 'f32[128,128]{1,0:T(8,128)}', space=vmem, size = 0x10000, scoped, tag = 'scratch operand']
  #allocation4 [shape = 'f32[2,128]{1,0:T(2,128)}', space=vmem, size = 0x400, scoped, tag = 'scratch operand']
  #allocation5 [shape = 'f32[2,128]{1,0:T(2,128)}', space=vmem, size = 0x400, scoped, tag = 'scratch operand']
  #allocation6 [shape = 'f32[2,128]{1,0:T(2,128)}', space=vmem, size = 0x400, scoped, tag = 'scratch operand']
  #allocation7 [shape = 'f32[2,128]{1,0:T(2,128)}', space=vmem, size = 0x400, scoped, tag = 'scratch operand']
  #allocation8 [shape = 'f32[1,1]{1,0:T(1,128)S(6)}', space=smem, size = 0x200, scoped, tag = 'scoped memory for tpu_custom_call.1']
  %s0 = inlined_call_operand.<no memory space> [shape: f32[1,1], index: 0, kind: input, shape index: {}]
  %s1 = inlined_call_operand.hbm [shape: s8[128,128], index: 1, kind: input, shape index: {}]
  %s2 = inlined_call_operand.hbm [shape: bf16[128,128], index: 2, kind: input, shape index: {}]
  %s3 = inlined_call_operand.hbm [shape: f32[128,128], index: 3, kind: input, shape index: {}]
  %s4 = inlined_call_operand.hbm [shape: f32[128,128], index: 4, kind: input, shape index: {}]
  %s5 = inlined_call_operand.hbm [shape: f32[128,128], index: 5, kind: input, shape index: {}]
  %s6 = inlined_call_operand.vmem [shape: f32[1,128], index: 6, kind: input, shape index: {}]
  %s7 = inlined_call_operand.vmem [shape: f32[1,128], index: 7, kind: input, shape index: {}]
  %s8 = inlined_call_operand.vmem [shape: f32[1,128], index: 8, kind: input, shape index: {}]
  %s9 = inlined_call_operand.vmem [shape: f32[1,128], index: 9, kind: input, shape index: {}]
  %s10 = inlined_call_operand.hbm [shape: f32[128,128], index: 10, kind: output, shape index: {}]
  %s11 = sld [smem:[#allocation0]]
  $region125: #{tpu_custom_call.1} parent=0
    _
  %s13 = ssub.s32 1, %s11
  %s14 = scalar_select 0, %s13, %s11
  %15 = sst [smem:[#allocation8]] %s0
  $region1: #{tpu_custom_call.1} parent=0
    #allocation9 [shape = 'u8[32768]{0}', space=vmem, size = 0x8000, scoped, tag = 'input window, operand 1']
    #allocation10 [shape = 's32[2]{0}', space=sflag, size = 0x8, scoped, tag = 'scoped memory for tpu_custom_call.1']
    #allocation11 [shape = 's32[2]{0}', space=sflag, size = 0x8, scoped, tag = 'scoped memory for tpu_custom_call.1']
    #allocation12 [shape = 'u8[32768]{0}', space=vmem, size = 0x8000, scoped, tag = 'input window, operand 2, single buffered']
    #allocation13 [shape = 's32[1]{0}', space=sflag, size = 0x4, scoped, tag = 'scoped memory for tpu_custom_call.1']
    #allocation14 [shape = 'u8[131072]{0}', space=vmem, size = 0x20000, scoped, tag = 'input window, operand 3']
    #allocation15 [shape = 'u8[65536]{0}', space=vmem, size = 0x10000, scoped, tag = 'input window, operand 4, single buffered']
    #allocation16 [shape = 'u8[65536]{0}', space=vmem, size = 0x10000, scoped, tag = 'input window, operand 5, single buffered']
    #allocation17 [shape = 's32[1]{0}', space=sflag, size = 0x4, scoped, tag = 'scoped memory for tpu_custom_call.1']
    #allocation18 [shape = 'u8[131072]{0}', space=vmem, size = 0x20000, scoped, tag = 'output window, operand 0']
    %16 = vsyncpa [#allocation10], 0
    %s17 = scalar_lea.sflag [#allocation10], 1
    %18 = vsyncpa %s17, 0
    %19 = vsyncpa [#allocation13], 0
    %20 = vsyncpa [#allocation17], 0
    %21 = vsyncpa [#allocation11], 0
    %s22 = scalar_lea.sflag [#allocation11], 1
    %23 = vsyncpa %s22, 0
    loop: start=0, step=1, limit=5
    $region2: #{tpu_custom_call.1} parent=1 // loop_pre_header
      _
    $region3: #{tpu_custom_call.1} parent=1 // loop_header
      %s25 = sphi 0, %s29
      %p26 = scmp.ge.s32.totalorder %s25, 5
      %s32 = sphi 0, %s44
      %s33 = sphi 0, %s40
      %s34 = sphi 0, %s32
      %s35 = sphi 0, %s33
      %s36 = sphi 0, %s34
      %s37 = sphi 0, %s35
      %s45 = sphi 0, %s45
      %s47 = sphi 0, %s45
      %s48 = sphi 0, %s47
      %s62 = sphi 0, %s48
      %s72 = sphi 0, %s74
      %s75 = sphi 0, %s72
      %s76 = sphi 0, %s75
      %s92 = sphi 0, %s76
      %s96 = sphi 0, %s96
      %s98 = sphi 0, %s96
      %s99 = sphi 0, %s98
      %s113 = sphi 0, %s99
      %s123 = sphi 0, %s125
      %s126 = sphi 0, %s123
      %s127 = sphi 0, %s126
      %s143 = sphi 0, %s127
      %s147 = sphi 0, %s147
      %s149 = sphi 0, %s147
      %s150 = sphi 0, %s149
      %s164 = sphi 0, %s150
      %s168 = sphi 0, %s168
      %s170 = sphi 0, %s168
      %s171 = sphi 0, %s170
      %s185 = sphi 0, %s171
      %s189 = sphi 0, %s189
      %s191 = sphi 0, %s189
      %s192 = sphi 0, %s191
      %s206 = sphi 0, %s192
      %s210 = sphi 0, %s210
      %s212 = sphi 0, %s210
      %s213 = sphi 0, %s212
      %s227 = sphi 0, %s213
      %s231 = sphi 0, %s231
      %s233 = sphi 0, %s231
      %s234 = sphi 0, %s233
      %s248 = sphi 0, %s234
      %s252 = sphi 0, %s252
      %s254 = sphi 0, %s252
      %s255 = sphi 0, %s254
      %s269 = sphi 0, %s255
      %s279 = sphi 0, %s281
      %s282 = sphi 0, %s279
      %s283 = sphi 0, %s282
      %s299 = sphi 0, %s283
    $region4: #{tpu_custom_call.1} parent=1 // loop_header_branch
      %28 = sbr.rel (%p26) target = $region8
    $region5: #{tpu_custom_call.1} parent=1 // loop_body
      %s30 = ssub.s32 %s25, 1
      %s31 = ssub.s32 %s25, 2
      %s38 = sadd.s32 1, %s33
      %p39 = scmp.ge.s32.totalorder %s38, 1
      %s40 = scalar_select %p39, 0, %s38
      %s41 = sadd.s32 1, %s32
      %s42 = scalar_select %p39, %s41, %s32
      %p43 = scmp.ge.s32.totalorder %s42, 3
      %s44 = scalar_select %p43, 0, %s42
      %s46 = sadd.s32 %s45, 1
      %p49 = scmp.eq.s32.totalorder %s25, 2
      %p50 = scmp.ne.s32.totalorder %s45, %s47
      %p51 = scmp.eq.s32.totalorder %s25, 0
      %p52 = por %p50, %p51
      %p53 = scmp.ne.s32.totalorder %s45, %s47
      %p54 = scmp.eq.s32.totalorder %s30, 2
      %p55 = por %p53, %p54
      %p56 = scmp.ne.s32.totalorder %s47, %s48
      %p57 = scmp.eq.s32.totalorder %s30, 0
      %p58 = por %p56, %p57
      %p59 = scmp.ne.s32.totalorder %s47, %s48
      %p60 = scmp.eq.s32.totalorder %s31, 2
      %p61 = por %p59, %p60
      %p63 = scmp.ne.s32.totalorder %s48, %s62
      %p64 = scmp.eq.s32.totalorder %s31, 0
      %p65 = por %p63, %p64
      %p66 = scmp.eq.s32.totalorder %s32, 0
      %s67 = scalar_select %p66, %s33, 0
      %p68 = scmp.eq.s32.totalorder %s44, 0
      %s69 = scalar_select %p68, %s40, 0
      %s70 = ssub.s32 %s67, %s69
      %p71 = scmp.eq.s32.totalorder %s70, 0
      %s73 = sadd.s32 %s72, 1
      %s74 = scalar_select %p71, %s72, %s73
      %p77 = pneg %p71
      %p78 = scmp.eq.s32.totalorder %s25, 2
      %p79 = por %p77, %p78
      %p80 = scmp.ne.s32.totalorder %s72, %s75
      %p81 = scmp.eq.s32.totalorder %s25, 0
      %p82 = por %p80, %p81
      %p83 = scmp.ne.s32.totalorder %s72, %s75
      %p84 = scmp.eq.s32.totalorder %s30, 2
      %p85 = por %p83, %p84
      %p86 = scmp.ne.s32.totalorder %s75, %s76
      %p87 = scmp.eq.s32.totalorder %s30, 0
      %p88 = por %p86, %p87
      %p89 = scmp.ne.s32.totalorder %s75, %s76
      %p90 = scmp.eq.s32.totalorder %s31, 2
      %p91 = por %p89, %p90
      %p93 = scmp.ne.s32.totalorder %s76, %s92
      %p94 = scmp.eq.s32.totalorder %s31, 0
      %p95 = por %p93, %p94
      %s97 = sadd.s32 %s96, 1
      %p100 = scmp.eq.s32.totalorder %s25, 2
      %p101 = scmp.ne.s32.totalorder %s96, %s98
      %p102 = scmp.eq.s32.totalorder %s25, 0
      %p103 = por %p101, %p102
      %p104 = scmp.ne.s32.totalorder %s96, %s98
      %p105 = scmp.eq.s32.totalorder %s30, 2
      %p106 = por %p104, %p105
      %p107 = scmp.ne.s32.totalorder %s98, %s99
      %p108 = scmp.eq.s32.totalorder %s30, 0
      %p109 = por %p107, %p108
      %p110 = scmp.ne.s32.totalorder %s98, %s99
      %p111 = scmp.eq.s32.totalorder %s31, 2
      %p112 = por %p110, %p111
      %p114 = scmp.ne.s32.totalorder %s99, %s113
      %p115 = scmp.eq.s32.totalorder %s31, 0
      %p116 = por %p114, %p115
      %p117 = scmp.eq.s32.totalorder %s32, 0
      %s118 = scalar_select %p117, %s33, 0
      %p119 = scmp.eq.s32.totalorder %s44, 0
      %s120 = scalar_select %p119, %s40, 0
      %s121 = ssub.s32 %s118, %s120
      %p122 = scmp.eq.s32.totalorder %s121, 0
      %s124 = sadd.s32 %s123, 1
      %s125 = scalar_select %p122, %s123, %s124
      %p128 = pneg %p122
      %p129 = scmp.eq.s32.totalorder %s25, 2
      %p130 = por %p128, %p129
      %p131 = scmp.ne.s32.totalorder %s123, %s126
      %p132 = scmp.eq.s32.totalorder %s25, 0
      %p133 = por %p131, %p132
      %p134 = scmp.ne.s32.totalorder %s123, %s126
      %p135 = scmp.eq.s32.totalorder %s30, 2
      %p136 = por %p134, %p135
      %p137 = scmp.ne.s32.totalorder %s126, %s127
      %p138 = scmp.eq.s32.totalorder %s30, 0
      %p139 = por %p137, %p138
      %p140 = scmp.ne.s32.totalorder %s126, %s127
      %p141 = scmp.eq.s32.totalorder %s31, 2
      %p142 = por %p140, %p141
      %p144 = scmp.ne.s32.totalorder %s127, %s143
      %p145 = scmp.eq.s32.totalorder %s31, 0
      %p146 = por %p144, %p145
      %s148 = sadd.s32 %s147, 1
      %p151 = scmp.eq.s32.totalorder %s25, 2
      %p152 = scmp.ne.s32.totalorder %s147, %s149
      %p153 = scmp.eq.s32.totalorder %s25, 0
      %p154 = por %p152, %p153
      %p155 = scmp.ne.s32.totalorder %s147, %s149
      %p156 = scmp.eq.s32.totalorder %s30, 2
      %p157 = por %p155, %p156
      %p158 = scmp.ne.s32.totalorder %s149, %s150
      %p159 = scmp.eq.s32.totalorder %s30, 0
      %p160 = por %p158, %p159
      %p161 = scmp.ne.s32.totalorder %s149, %s150
      %p162 = scmp.eq.s32.totalorder %s31, 2
      %p163 = por %p161, %p162
      %p165 = scmp.ne.s32.totalorder %s150, %s164
      %p166 = scmp.eq.s32.totalorder %s31, 0
      %p167 = por %p165, %p166
      %s169 = sadd.s32 %s168, 1
      %p172 = scmp.eq.s32.totalorder %s25, 2
      %p173 = scmp.ne.s32.totalorder %s168, %s170
      %p174 = scmp.eq.s32.totalorder %s25, 0
      %p175 = por %p173, %p174
      %p176 = scmp.ne.s32.totalorder %s168, %s170
      %p177 = scmp.eq.s32.totalorder %s30, 2
      %p178 = por %p176, %p177
      %p179 = scmp.ne.s32.totalorder %s170, %s171
      %p180 = scmp.eq.s32.totalorder %s30, 0
      %p181 = por %p179, %p180
      %p182 = scmp.ne.s32.totalorder %s170, %s171
      %p183 = scmp.eq.s32.totalorder %s31, 2
      %p184 = por %p182, %p183
      %p186 = scmp.ne.s32.totalorder %s171, %s185
      %p187 = scmp.eq.s32.totalorder %s31, 0
      %p188 = por %p186, %p187
      %s190 = sadd.s32 %s189, 1
      %p193 = scmp.eq.s32.totalorder %s25, 2
      %p194 = scmp.ne.s32.totalorder %s189, %s191
      %p195 = scmp.eq.s32.totalorder %s25, 0
      %p196 = por %p194, %p195
      %p197 = scmp.ne.s32.totalorder %s189, %s191
      %p198 = scmp.eq.s32.totalorder %s30, 2
      %p199 = por %p197, %p198
      %p200 = scmp.ne.s32.totalorder %s191, %s192
      %p201 = scmp.eq.s32.totalorder %s30, 0
      %p202 = por %p200, %p201
      %p203 = scmp.ne.s32.totalorder %s191, %s192
      %p204 = scmp.eq.s32.totalorder %s31, 2
      %p205 = por %p203, %p204
      %p207 = scmp.ne.s32.totalorder %s192, %s206
      %p208 = scmp.eq.s32.totalorder %s31, 0
      %p209 = por %p207, %p208
      %s211 = sadd.s32 %s210, 1
      %p214 = scmp.eq.s32.totalorder %s25, 2
      %p215 = scmp.ne.s32.totalorder %s210, %s212
      %p216 = scmp.eq.s32.totalorder %s25, 0
      %p217 = por %p215, %p216
      %p218 = scmp.ne.s32.totalorder %s210, %s212
      %p219 = scmp.eq.s32.totalorder %s30, 2
      %p220 = por %p218, %p219
      %p221 = scmp.ne.s32.totalorder %s212, %s213
      %p222 = scmp.eq.s32.totalorder %s30, 0
      %p223 = por %p221, %p222
      %p224 = scmp.ne.s32.totalorder %s212, %s213
      %p225 = scmp.eq.s32.totalorder %s31, 2
      %p226 = por %p224, %p225
      %p228 = scmp.ne.s32.totalorder %s213, %s227
      %p229 = scmp.eq.s32.totalorder %s31, 0
      %p230 = por %p228, %p229
      %s232 = sadd.s32 %s231, 1
      %p235 = scmp.eq.s32.totalorder %s25, 2
      %p236 = scmp.ne.s32.totalorder %s231, %s233
      %p237 = scmp.eq.s32.totalorder %s25, 0
      %p238 = por %p236, %p237
      %p239 = scmp.ne.s32.totalorder %s231, %s233
      %p240 = scmp.eq.s32.totalorder %s30, 2
      %p241 = por %p239, %p240
      %p242 = scmp.ne.s32.totalorder %s233, %s234
      %p243 = scmp.eq.s32.totalorder %s30, 0
      %p244 = por %p242, %p243
      %p245 = scmp.ne.s32.totalorder %s233, %s234
      %p246 = scmp.eq.s32.totalorder %s31, 2
      %p247 = por %p245, %p246
      %p249 = scmp.ne.s32.totalorder %s234, %s248
      %p250 = scmp.eq.s32.totalorder %s31, 0
      %p251 = por %p249, %p250
      %s253 = sadd.s32 %s252, 1
      %p256 = scmp.eq.s32.totalorder %s25, 2
      %p257 = scmp.ne.s32.totalorder %s252, %s254
      %p258 = scmp.eq.s32.totalorder %s25, 0
      %p259 = por %p257, %p258
      %p260 = scmp.ne.s32.totalorder %s252, %s254
      %p261 = scmp.eq.s32.totalorder %s30, 2
      %p262 = por %p260, %p261
      %p263 = scmp.ne.s32.totalorder %s254, %s255
      %p264 = scmp.eq.s32.totalorder %s30, 0
      %p265 = por %p263, %p264
      %p266 = scmp.ne.s32.totalorder %s254, %s255
      %p267 = scmp.eq.s32.totalorder %s31, 2
      %p268 = por %p266, %p267
      %p270 = scmp.ne.s32.totalorder %s255, %s269
      %p271 = scmp.eq.s32.totalorder %s31, 0
      %p272 = por %p270, %p271
      %p273 = scmp.eq.s32.totalorder %s32, 2
      %s274 = scalar_select %p273, %s33, 0
      %p275 = scmp.eq.s32.totalorder %s44, 2
      %s276 = scalar_select %p275, %s40, 0
      %s277 = ssub.s32 %s274, %s276
      %p278 = scmp.eq.s32.totalorder %s277, 0
      %s280 = sadd.s32 %s279, 1
      %s281 = scalar_select %p278, %s279, %s280
      %p284 = pneg %p278
      %p285 = scmp.eq.s32.totalorder %s25, 2
      %p286 = por %p284, %p285
      %p287 = scmp.ne.s32.totalorder %s279, %s282
      %p288 = scmp.eq.s32.totalorder %s25, 0
      %p289 = por %p287, %p288
      %p290 = scmp.ne.s32.totalorder %s279, %s282
      %p291 = scmp.eq.s32.totalorder %s30, 2
      %p292 = por %p290, %p291
      %p293 = scmp.ne.s32.totalorder %s282, %s283
      %p294 = scmp.eq.s32.totalorder %s30, 0
      %p295 = por %p293, %p294
      %p296 = scmp.ne.s32.totalorder %s282, %s283
      %p297 = scmp.eq.s32.totalorder %s31, 2
      %p298 = por %p296, %p297
      %p300 = scmp.ne.s32.totalorder %s283, %s299
      %p301 = scmp.eq.s32.totalorder %s31, 0
      %p302 = por %p300, %p301
      %p303 = scmp.le.s32.totalorder 1, %s25
      %p304 = scmp.lt.s32.totalorder %s25, 4
      %p305 = pnand %p303, %p304
      %p306 = pneg %p305
      // Predicated region
      $region9: #{tpu_custom_call.1} parent=5 // pred_check
        _
      $region10: #{tpu_custom_call.1} parent=5 // pred_check_branch
        %308 = sbr.rel (%p305) target = $region12
      $region11: #{tpu_custom_call.1} parent=5 // pred_region
        %s309 = ssub.s32 %s25, 1
        // Predicated region
        $region13: #{tpu_custom_call.1} parent=11 // pred_check
          %p310 = pneg %p58
        $region14: #{tpu_custom_call.1} parent=11 // pred_check_branch
          %312 = sbr.rel (%p310) target = $region16
        $region15: #{tpu_custom_call.1} parent=11 // pred_region
          _
        $region16: #{tpu_custom_call.1} parent=11 // pred_fallthru
          _
        // Predicated region
        $region17: #{tpu_custom_call.1} parent=11 // pred_check
          %p313 = pneg %p109
        $region18: #{tpu_custom_call.1} parent=11 // pred_check_branch
          %315 = sbr.rel (%p313) target = $region20
        $region19: #{tpu_custom_call.1} parent=11 // pred_region
          %s317 = ssub.s32 1024, 1024
          %318 = vsyncadd [#allocation13], %s317
          %s319 = sshll.u32 [#allocation12], 4
          %s320 = int_to_ptr.vmem [resolvable:$true] %s319
          %325 = dma.hbm_to_vmem [thread:$0]  %s2, 1024, %s320, [#allocation13], 64, 64, 4
        $region20: #{tpu_custom_call.1} parent=11 // pred_fallthru
          _
        // Predicated region
        $region21: #{tpu_custom_call.1} parent=11 // pred_check
          %p326 = pneg %p160
        $region22: #{tpu_custom_call.1} parent=11 // pred_check_branch
          %328 = sbr.rel (%p326) target = $region24
        $region23: #{tpu_custom_call.1} parent=11 // pred_region
          %s330 = ssub.s32 2048, 2048
          %331 = vsyncadd [#allocation13], %s330
          %s332 = sshll.u32 [#allocation15], 4
          %s333 = int_to_ptr.vmem [resolvable:$true] %s332
          %338 = dma.hbm_to_vmem [thread:$0]  %s4, 2048, %s333, [#allocation13], 128, 128, 8
        $region24: #{tpu_custom_call.1} parent=11 // pred_fallthru
          _
        // Predicated region
        $region25: #{tpu_custom_call.1} parent=11 // pred_check
          %p339 = pneg %p181
        $region26: #{tpu_custom_call.1} parent=11 // pred_check_branch
          %341 = sbr.rel (%p339) target = $region28
        $region27: #{tpu_custom_call.1} parent=11 // pred_region
          %s343 = ssub.s32 2048, 2048
          %344 = vsyncadd [#allocation17], %s343
          %s345 = sshll.u32 [#allocation16], 4
          %s346 = int_to_ptr.vmem [resolvable:$true] %s345
          %351 = dma.hbm_to_vmem [thread:$0]  %s5, 2048, %s346, [#allocation17], 128, 128, 8
        $region28: #{tpu_custom_call.1} parent=11 // pred_fallthru
          _
        // Predicated region
        $region29: #{tpu_custom_call.1} parent=11 // pred_check
          %p352 = pneg %p202
        $region30: #{tpu_custom_call.1} parent=11 // pred_check_branch
          %354 = sbr.rel (%p352) target = $region32
        $region31: #{tpu_custom_call.1} parent=11 // pred_region
          _
        $region32: #{tpu_custom_call.1} parent=11 // pred_fallthru
          _
        // Predicated region
        $region33: #{tpu_custom_call.1} parent=11 // pred_check
          %p355 = pneg %p223
        $region34: #{tpu_custom_call.1} parent=11 // pred_check_branch
          %357 = sbr.rel (%p355) target = $region36
        $region35: #{tpu_custom_call.1} parent=11 // pred_region
          _
        $region36: #{tpu_custom_call.1} parent=11 // pred_fallthru
          _
        // Predicated region
        $region37: #{tpu_custom_call.1} parent=11 // pred_check
          %p358 = pneg %p244
        $region38: #{tpu_custom_call.1} parent=11 // pred_check_branch
          %360 = sbr.rel (%p358) target = $region40
        $region39: #{tpu_custom_call.1} parent=11 // pred_region
          _
        $region40: #{tpu_custom_call.1} parent=11 // pred_fallthru
          _
        // Predicated region
        $region41: #{tpu_custom_call.1} parent=11 // pred_check
          %p361 = pneg %p265
        $region42: #{tpu_custom_call.1} parent=11 // pred_check_branch
          %363 = sbr.rel (%p361) target = $region44
        $region43: #{tpu_custom_call.1} parent=11 // pred_region
          _
        $region44: #{tpu_custom_call.1} parent=11 // pred_fallthru
          _
      $region12: #{tpu_custom_call.1} parent=5 // pred_fallthru
        _
      %p364 = scmp.lt.s32.totalorder %s25, 3
      // Predicated region
      $region45: #{tpu_custom_call.1} parent=5 // pred_check
        %p365 = pneg %p364
      $region46: #{tpu_custom_call.1} parent=5 // pred_check_branch
        %367 = sbr.rel (%p365) target = $region48
      $region47: #{tpu_custom_call.1} parent=5 // pred_region
        // Predicated region
        $region49: #{tpu_custom_call.1} parent=47 // pred_check
          %p368 = pneg %p82
        $region50: #{tpu_custom_call.1} parent=47 // pred_check_branch
          %370 = sbr.rel (%p368) target = $region52
        $region51: #{tpu_custom_call.1} parent=47 // pred_region
          %s371 = sand.u32 %s25, 1
          %s372 = scalar_lea.sflag [#allocation10], %s371
          %s373 = sand.u32 %s72, 1
          %s374 = smul.addr %s373, 32
          %s375 = scalar_lea.vmem [#allocation9], %s374
          %p376 = scmp.eq.s32.totalorder %s32, 0
          %s377 = scalar_select %p376, %s33, 0
          %s378 = smul.u32 4, %s377
          %s380 = ssub.s32 512, 512
          %381 = vsyncadd %s372, %s380
          %s382 = smul.addr %s378, 128
          %s383 = scalar_lea.hbm %s1, %s382
          %s384 = sshll.u32 %s375, 4
          %s385 = int_to_ptr.vmem [resolvable:$true] %s384
          %390 = dma.hbm_to_vmem [thread:$0]  %s383, 512, %s385, %s372, 128, 128, 8
        $region52: #{tpu_custom_call.1} parent=47 // pred_fallthru
          _
        // Predicated region
        $region53: #{tpu_custom_call.1} parent=47 // pred_check
          %p391 = pneg %p133
        $region54: #{tpu_custom_call.1} parent=47 // pred_check_branch
          %393 = sbr.rel (%p391) target = $region56
        $region55: #{tpu_custom_call.1} parent=47 // pred_region
          %s394 = sand.u32 %s25, 1
          %s395 = scalar_lea.sflag [#allocation10], %s394
          %s396 = sand.u32 %s123, 1
          %s397 = smul.addr %s396, 128
          %s398 = scalar_lea.vmem [#allocation14], %s397
          %p399 = scmp.eq.s32.totalorder %s32, 0
          %s400 = scalar_select %p399, %s33, 0
          %s401 = smul.u32 16, %s400
          %s403 = ssub.s32 2048, 2048
          %404 = vsyncadd %s395, %s403
          %s405 = smul.addr %s401, 128
          %s406 = scalar_lea.hbm %s3, %s405
          %s407 = sshll.u32 %s398, 4
          %s408 = int_to_ptr.vmem [resolvable:$true] %s407
          %413 = dma.hbm_to_vmem [thread:$0]  %s406, 2048, %s408, %s395, 128, 128, 8
        $region56: #{tpu_custom_call.1} parent=47 // pred_fallthru
          _
      $region48: #{tpu_custom_call.1} parent=5 // pred_fallthru
        _
      %p414 = scmp.le.s32.totalorder 1, %s25
      %p415 = scmp.lt.s32.totalorder %s25, 4
      %p416 = pnand %p414, %p415
      %p417 = pneg %p416
      // Predicated region
      $region57: #{tpu_custom_call.1} parent=5 // pred_check
        _
      $region58: #{tpu_custom_call.1} parent=5 // pred_check_branch
        %419 = sbr.rel (%p416) target = $region60
      $region59: #{tpu_custom_call.1} parent=5 // pred_region
        %s420 = ssub.s32 %s25, 1
        %s421 = sand.u32 %s30, 1
        %s422 = scalar_lea.sflag [#allocation10], %s421
        %s423 = sand.u32 %s75, 1
        %s424 = smul.addr %s423, 32
        %s425 = scalar_lea.vmem [#allocation9], %s424
        // Predicated region
        $region61: #{tpu_custom_call.1} parent=59 // pred_check
          %p426 = pneg %p88
        $region62: #{tpu_custom_call.1} parent=59 // pred_check_branch
          %428 = sbr.rel (%p426) target = $region64
        $region63: #{tpu_custom_call.1} parent=59 // pred_region
          %429 = dma.done %s422, 512
        $region64: #{tpu_custom_call.1} parent=59 // pred_fallthru
          _
        // Predicated region
        $region65: #{tpu_custom_call.1} parent=59 // pred_check
          %p430 = pneg %p109
        $region66: #{tpu_custom_call.1} parent=59 // pred_check_branch
          %432 = sbr.rel (%p430) target = $region68
        $region67: #{tpu_custom_call.1} parent=59 // pred_region
          %433 = dma.done [#allocation13], 1024
        $region68: #{tpu_custom_call.1} parent=59 // pred_fallthru
          _
        %s434 = sand.u32 %s30, 1
        %s435 = scalar_lea.sflag [#allocation10], %s434
        %s436 = sand.u32 %s126, 1
        %s437 = smul.addr %s436, 128
        %s438 = scalar_lea.vmem [#allocation14], %s437
        // Predicated region
        $region69: #{tpu_custom_call.1} parent=59 // pred_check
          %p439 = pneg %p139
        $region70: #{tpu_custom_call.1} parent=59 // pred_check_branch
          %441 = sbr.rel (%p439) target = $region72
        $region71: #{tpu_custom_call.1} parent=59 // pred_region
          %442 = dma.done %s435, 2048
        $region72: #{tpu_custom_call.1} parent=59 // pred_fallthru
          _
        // Predicated region
        $region73: #{tpu_custom_call.1} parent=59 // pred_check
          %p443 = pneg %p160
        $region74: #{tpu_custom_call.1} parent=59 // pred_check_branch
          %445 = sbr.rel (%p443) target = $region76
        $region75: #{tpu_custom_call.1} parent=59 // pred_region
          %446 = dma.done [#allocation13], 2048
        $region76: #{tpu_custom_call.1} parent=59 // pred_fallthru
          _
        // Predicated region
        $region77: #{tpu_custom_call.1} parent=59 // pred_check
          %p447 = pneg %p181
        $region78: #{tpu_custom_call.1} parent=59 // pred_check_branch
          %449 = sbr.rel (%p447) target = $region80
        $region79: #{tpu_custom_call.1} parent=59 // pred_region
          %450 = dma.done [#allocation17], 2048
        $region80: #{tpu_custom_call.1} parent=59 // pred_fallthru
          _
        %p451 = pneg %p58
        %p452 = pneg %p55
        %s453 = sand.u32 %s30, 1
        %s454 = scalar_lea.sflag [#allocation10], %s453
        %s455 = sand.u32 %s75, 1
        %s456 = smul.addr %s455, 32
        %s457 = scalar_lea.vmem [#allocation9], %s456
        %p458 = pneg %p88
        %p459 = pneg %p85
        %p460 = pneg %p109
        %p461 = pneg %p106
        %s462 = sand.u32 %s30, 1
        %s463 = scalar_lea.sflag [#allocation10], %s462
        %s464 = sand.u32 %s126, 1
        %s465 = smul.addr %s464, 128
        %s466 = scalar_lea.vmem [#allocation14], %s465
        %p467 = pneg %p139
        %p468 = pneg %p136
        %p469 = pneg %p160
        %p470 = pneg %p157
        %p471 = pneg %p181
        %p472 = pneg %p178
        %p473 = pneg %p202
        %p474 = pneg %p199
        %p475 = pneg %p223
        %p476 = pneg %p220
        %p477 = pneg %p244
        %p478 = pneg %p241
        %p479 = pneg %p265
        %p480 = pneg %p262
        %p481 = pneg %p295
        %p482 = pneg %p292
        %s483 = sand.u32 %s282, 1
        %s484 = scalar_lea.sflag [#allocation11], %s483
        %s485 = sand.u32 %s282, 1
        %s486 = smul.addr %s485, 128
        %s487 = scalar_lea.vmem [#allocation18], %s486
        %p488 = scmp.eq.s32.totalorder %s34, 0
        %s489 = scalar_select %p488, %s35, 0
        %s490 = smul.u32 4, %s489
        %p491 = scmp.eq.s32.totalorder %s34, 0
        %s492 = scalar_select %p491, %s35, 0
        %s493 = smul.u32 16, %s492
        %p494 = scmp.eq.s32.totalorder %s34, 2
        %s495 = scalar_select %p494, %s35, 0
        %s496 = smul.u32 16, %s495
        %s498 = smul.u32 %s35, 128
        %p499 = scmp.eq.s32.totalorder %s34, 0
        %p500 = scmp.eq.s32.totalorder %s35, 0
        %p501 = pnand %p499, %p500
        %p502 = pneg %p501
        // Predicated region
        $region81: #{tpu_custom_call.1} parent=59 // pred_check
          _
        $region82: #{tpu_custom_call.1} parent=59 // pred_check_branch
          %504 = sbr.rel (%p501) target = $region84
        $region83: #{tpu_custom_call.1} parent=59 // pred_region
          %505 = vst [vmem:[#allocation4] sm:$0x3] 0.0
          %506 = vst [vmem:[#allocation5] sm:$0x3] 0.0
        $region84: #{tpu_custom_call.1} parent=59 // pred_fallthru
          _
        // Predicated region
        $region85: #{tpu_custom_call.1} parent=59 // pred_check
          %p507 = pneg %p499
        $region86: #{tpu_custom_call.1} parent=59 // pred_check_branch
          %509 = sbr.rel (%p507) target = $region88
        $region87: #{tpu_custom_call.1} parent=59 // pred_region
          %v510 = vld [vmem:[%s425] sm:$0xff]
          %v511 = vld [vmem:[%s425 + $0x8] sm:$0xff]
          %v512 = vld [vmem:[%s425 + $0x10] sm:$0xff]
          %v513 = vld [vmem:[%s425 + $0x18] sm:$0xff]
          %v514 = vunpack.c.l.s8.bf16 %v510
          %v515 = vunpack.c.h.s8.bf16 %v510
          %v516 = vunpack.c.l.s8.bf16 %v511
          %v517 = vunpack.c.h.s8.bf16 %v511
          %v518 = vunpack.c.l.s8.bf16 %v512
          %v519 = vunpack.c.h.s8.bf16 %v512
          %v520 = vunpack.c.l.s8.bf16 %v513
          %v521 = vunpack.c.h.s8.bf16 %v513
          %v522 = vld [vmem:[#allocation12] sm:$0xf]
          %v523 = vld [vmem:[#allocation12 + $0x4] sm:$0xf]
          %v524 = vld [vmem:[#allocation12 + $0x8] sm:$0xf]
          %v525 = vld [vmem:[#allocation12 + $0xc] sm:$0xf]
          %v526 = vld [vmem:[#allocation12 + $0x10] sm:$0xf]
          %v527 = vld [vmem:[#allocation12 + $0x14] sm:$0xf]
          %v528 = vld [vmem:[#allocation12 + $0x18] sm:$0xf]
          %v529 = vld [vmem:[#allocation12 + $0x1c] sm:$0xf]
          %v530 = vld [vmem:[#allocation12 + $0x20] sm:$0xf]
          %v531 = vld [vmem:[#allocation12 + $0x24] sm:$0xf]
          %v532 = vld [vmem:[#allocation12 + $0x28] sm:$0xf]
          %v533 = vld [vmem:[#allocation12 + $0x2c] sm:$0xf]
          %v534 = vld [vmem:[#allocation12 + $0x30] sm:$0xf]
          %v535 = vld [vmem:[#allocation12 + $0x34] sm:$0xf]
          %v536 = vld [vmem:[#allocation12 + $0x38] sm:$0xf]
          %v537 = vld [vmem:[#allocation12 + $0x3c] sm:$0xf]
          %s538 = sld [smem:[#allocation8]]
          %s539 = sadd.f32 %s538, 1.0
          %v540 = vld [vmem:[%s438] sm:$0xff]
          %v541 = vld [vmem:[%s438 + $0x8] sm:$0xff]
          %v542 = vld [vmem:[%s438 + $0x10] sm:$0xff]
          %v543 = vld [vmem:[%s438 + $0x18] sm:$0xff]
          %v544 = vld [vmem:[%s438 + $0x20] sm:$0xff]
          %v545 = vld [vmem:[%s438 + $0x28] sm:$0xff]
          %v546 = vld [vmem:[%s438 + $0x30] sm:$0xff]
          %v547 = vld [vmem:[%s438 + $0x38] sm:$0xff]
          %v548 = vld [vmem:[%s438 + $0x40] sm:$0xff]
          %v549 = vld [vmem:[%s438 + $0x48] sm:$0xff]
          %v550 = vld [vmem:[%s438 + $0x50] sm:$0xff]
          %v551 = vld [vmem:[%s438 + $0x58] sm:$0xff]
          %v552 = vld [vmem:[%s438 + $0x60] sm:$0xff]
          %v553 = vld [vmem:[%s438 + $0x68] sm:$0xff]
          %v554 = vld [vmem:[%s438 + $0x70] sm:$0xff]
          %v555 = vld [vmem:[%s438 + $0x78] sm:$0xff]
          %v556 = vstv %s539
          %v557 = vmul.f32 %v556, %v540
          %v558 = vmul.f32 %v556, %v541
          %v559 = vmul.f32 %v556, %v542
          %v560 = vmul.f32 %v556, %v543
          %v561 = vmul.f32 %v556, %v544
          %v562 = vmul.f32 %v556, %v545
          %v563 = vmul.f32 %v556, %v546
          %v564 = vmul.f32 %v556, %v547
          %v565 = vmul.f32 %v556, %v548
          %v566 = vmul.f32 %v556, %v549
          %v567 = vmul.f32 %v556, %v550
          %v568 = vmul.f32 %v556, %v551
          %v569 = vmul.f32 %v556, %v552
          %v570 = vmul.f32 %v556, %v553
          %v571 = vmul.f32 %v556, %v554
          %v572 = vmul.f32 %v556, %v555
          %v589 = vunpack.c.l.b16 %v522
          %v590 = vunpack.c.l.b16 %v523
          %v591 = vunpack.c.l.b16 %v524
          %v592 = vunpack.c.l.b16 %v525
          %v593 = vunpack.c.l.b16 %v526
          %v594 = vunpack.c.l.b16 %v527
          %v595 = vunpack.c.l.b16 %v528
          %v596 = vunpack.c.l.b16 %v529
          %v597 = vunpack.c.l.b16 %v530
          %v598 = vunpack.c.l.b16 %v531
          %v599 = vunpack.c.l.b16 %v532
          %v600 = vunpack.c.l.b16 %v533
          %v601 = vunpack.c.l.b16 %v534
          %v602 = vunpack.c.l.b16 %v535
          %v603 = vunpack.c.l.b16 %v536
          %v604 = vunpack.c.l.b16 %v537
          %v605 = vpack.c.b16 %v590, %v589
          %v606 = vpack.c.b16 %v592, %v591
          %v607 = vpack.c.b16 %v594, %v593
          %v608 = vpack.c.b16 %v596, %v595
          %v609 = vpack.c.b16 %v598, %v597
          %v610 = vpack.c.b16 %v600, %v599
          %v611 = vpack.c.b16 %v602, %v601
          %v612 = vpack.c.b16 %v604, %v603
          %621 = vmatprep.subr.bf16.mxu0 0
          %622 = vmatpush1.bf16.msra.mxu0 %v605
          %623 = vmatprep.subr.bf16.mxu0 0
          %624 = vmatpush1.bf16.msra.mxu0 %v606
          %625 = vmatprep.subr.bf16.mxu0 0
          %626 = vmatpush1.bf16.msra.mxu0 %v607
          %627 = vmatprep.subr.bf16.mxu0 0
          %628 = vmatpush1.bf16.msra.mxu0 %v608
          %629 = vmatprep.subr.bf16.mxu0 0
          %630 = vmatpush1.bf16.msra.mxu0 %v609
          %631 = vmatprep.subr.bf16.mxu0 0
          %632 = vmatpush1.bf16.msra.mxu0 %v610
          %633 = vmatprep.subr.bf16.mxu0 0
          %634 = vmatpush1.bf16.msra.mxu0 %v611
          %635 = vmatprep.subr.bf16.mxu0 0
          %636 = vmatpush1.bf16.msra.mxu0 %v612
          %637 = vmatprep.subr.bf16.mxu0 0
          %638 = vmatpush1.bf16.msra.mxu0 0
          %639 = vmatprep.subr.bf16.mxu0 0
          %640 = vmatpush1.bf16.msra.mxu0 0
          %641 = vmatprep.subr.bf16.mxu0 0
          %642 = vmatpush1.bf16.msra.mxu0 0
          %643 = vmatprep.subr.bf16.mxu0 0
          %644 = vmatpush1.bf16.msra.mxu0 0
          %645 = vmatprep.subr.bf16.mxu0 0
          %646 = vmatpush1.bf16.msra.mxu0 0
          %647 = vmatprep.subr.bf16.mxu0 0
          %648 = vmatpush1.bf16.msra.mxu0 0
          %649 = vmatprep.subr.bf16.mxu0 0
          %650 = vmatpush1.bf16.msra.mxu0 0
          %651 = vmatprep.subr.bf16.mxu0 0
          %652 = vmatpush1.bf16.msra.mxu0 0
          %653 = vmatprep.mubr.bf16.mxu0 0
          %654 = vmatmul.mubr.bf16.gmra.mrb[0].mxu0 %v514
          %v655 = vpop.f32.mrb[0].mxu0
          %v656 = vadd.f32 %v557, %v655
          %v657 = vpop.f32.mrb[0].mxu0
          %v658 = vpop.f32.mrb[0].mxu0
          %v659 = vadd.f32 %v558, %v658
          %v660 = vpop.f32.mrb[0].mxu0
          %661 = vmatprep.mubr.bf16.mxu0 0
          %662 = vmatmul.mubr.bf16.gmra.mrb[0].mxu0 %v515
          %v663 = vpop.f32.mrb[0].mxu0
          %v664 = vadd.f32 %v559, %v663
          %v665 = vpop.f32.mrb[0].mxu0
          %v666 = vpop.f32.mrb[0].mxu0
          %v667 = vadd.f32 %v560, %v666
          %v668 = vpop.f32.mrb[0].mxu0
          %669 = vmatprep.mubr.bf16.mxu0 0
          %670 = vmatmul.mubr.bf16.gmra.mrb[0].mxu0 %v516
          %v671 = vpop.f32.mrb[0].mxu0
          %v672 = vadd.f32 %v561, %v671
          %v673 = vpop.f32.mrb[0].mxu0
          %v674 = vpop.f32.mrb[0].mxu0
          %v675 = vadd.f32 %v562, %v674
          %v676 = vpop.f32.mrb[0].mxu0
          %677 = vmatprep.mubr.bf16.mxu0 0
          %678 = vmatmul.mubr.bf16.gmra.mrb[0].mxu0 %v517
          %v679 = vpop.f32.mrb[0].mxu0
          %v680 = vadd.f32 %v563, %v679
          %v681 = vpop.f32.mrb[0].mxu0
          %v682 = vpop.f32.mrb[0].mxu0
          %v683 = vadd.f32 %v564, %v682
          %v684 = vpop.f32.mrb[0].mxu0
          %685 = vmatprep.mubr.bf16.mxu0 0
          %686 = vmatmul.mubr.bf16.gmra.mrb[0].mxu0 %v518
          %v687 = vpop.f32.mrb[0].mxu0
          %v688 = vadd.f32 %v565, %v687
          %v689 = vpop.f32.mrb[0].mxu0
          %v690 = vpop.f32.mrb[0].mxu0
          %v691 = vadd.f32 %v566, %v690
          %v692 = vpop.f32.mrb[0].mxu0
          %693 = vmatprep.mubr.bf16.mxu0 0
          %694 = vmatmul.mubr.bf16.gmra.mrb[0].mxu0 %v519
          %v695 = vpop.f32.mrb[0].mxu0
          %v696 = vadd.f32 %v567, %v695
          %v697 = vpop.f32.mrb[0].mxu0
          %v698 = vpop.f32.mrb[0].mxu0
          %v699 = vadd.f32 %v568, %v698
          %v700 = vpop.f32.mrb[0].mxu0
          %701 = vmatprep.mubr.bf16.mxu0 0
          %702 = vmatmul.mubr.bf16.gmra.mrb[0].mxu0 %v520
          %v703 = vpop.f32.mrb[0].mxu0
          %v704 = vadd.f32 %v569, %v703
          %v705 = vpop.f32.mrb[0].mxu0
          %v706 = vpop.f32.mrb[0].mxu0
          %v707 = vadd.f32 %v570, %v706
          %v708 = vpop.f32.mrb[0].mxu0
          %709 = vmatprep.mubr.bf16.mxu0 0
          %710 = vmatmul.mubr.bf16.gmra.mrb[0].mxu0 %v521
          %v711 = vpop.f32.mrb[0].mxu0
          %v712 = vadd.f32 %v571, %v711
          %v713 = vpop.f32.mrb[0].mxu0
          %v714 = vpop.f32.mrb[0].mxu0
          %v715 = vadd.f32 %v572, %v714
          %v716 = vpop.f32.mrb[0].mxu0
          %717 = vdwg.mxu0
          %v718 = vld [vmem:[#allocation15] sm:$0xff]
          %v719 = vld [vmem:[#allocation15 + $0x8] sm:$0xff]
          %v720 = vld [vmem:[#allocation15 + $0x10] sm:$0xff]
          %v721 = vld [vmem:[#allocation15 + $0x18] sm:$0xff]
          %v722 = vld [vmem:[#allocation15 + $0x20] sm:$0xff]
          %v723 = vld [vmem:[#allocation15 + $0x28] sm:$0xff]
          %v724 = vld [vmem:[#allocation15 + $0x30] sm:$0xff]
          %v725 = vld [vmem:[#allocation15 + $0x38] sm:$0xff]
          %v726 = vld [vmem:[#allocation15 + $0x40] sm:$0xff]
          %v727 = vld [vmem:[#allocation15 + $0x48] sm:$0xff]
          %v728 = vld [vmem:[#allocation15 + $0x50] sm:$0xff]
          %v729 = vld [vmem:[#allocation15 + $0x58] sm:$0xff]
          %v730 = vld [vmem:[#allocation15 + $0x60] sm:$0xff]
          %v731 = vld [vmem:[#allocation15 + $0x68] sm:$0xff]
          %v732 = vld [vmem:[#allocation15 + $0x70] sm:$0xff]
          %v733 = vld [vmem:[#allocation15 + $0x78] sm:$0xff]
          %734 = vmatprep.subr.mxu0 0.0
          %735 = vmatpush1.msra.mxu0 %v718
          %736 = vmatprep.subr.mxu0 0.0
          %737 = vmatpush1.msra.mxu0 %v719
          %738 = vmatprep.subr.mxu0 0.0
          %739 = vmatpush1.msra.mxu0 %v720
          %740 = vmatprep.subr.mxu0 0.0
          %741 = vmatpush1.msra.mxu0 %v721
          %742 = vmatprep.subr.mxu0 0.0
          %743 = vmatpush1.msra.mxu0 %v722
          %744 = vmatprep.subr.mxu0 0.0
          %745 = vmatpush1.msra.mxu0 %v723
          %746 = vmatprep.subr.mxu0 0.0
          %747 = vmatpush1.msra.mxu0 %v724
          %748 = vmatprep.subr.mxu0 0.0
          %749 = vmatpush1.msra.mxu0 %v725
          %750 = vmatprep.subr.mxu0 0.0
          %751 = vmatpush1.msra.mxu0 %v726
          %752 = vmatprep.subr.mxu0 0.0
          %753 = vmatpush1.msra.mxu0 %v727
          %754 = vmatprep.subr.mxu0 0.0
          %755 = vmatpush1.msra.mxu0 %v728
          %756 = vmatprep.subr.mxu0 0.0
          %757 = vmatpush1.msra.mxu0 %v729
          %758 = vmatprep.subr.mxu0 0.0
          %759 = vmatpush1.msra.mxu0 %v730
          %760 = vmatprep.subr.mxu0 0.0
          %761 = vmatpush1.msra.mxu0 %v731
          %762 = vmatprep.subr.mxu0 0.0
          %763 = vmatpush1.msra.mxu0 %v732
          %764 = vmatprep.subr.mxu0 0.0
          %765 = vmatpush1.msra.mxu0 %v733
          %766 = vmatprep.subr.mxu0 0.0
          %767 = vmatpush1.msra.mxu0 0.0
          %768 = vmatprep.subr.mxu0 0.0
          %769 = vmatpush1.msra.mxu0 0.0
          %770 = vmatprep.subr.mxu0 0.0
          %771 = vmatpush1.msra.mxu0 0.0
          %772 = vmatprep.subr.mxu0 0.0
          %773 = vmatpush1.msra.mxu0 0.0
          %774 = vmatprep.subr.mxu0 0.0
          %775 = vmatpush1.msra.mxu0 0.0
          %776 = vmatprep.subr.mxu0 0.0
          %777 = vmatpush1.msra.mxu0 0.0
          %778 = vmatprep.subr.mxu0 0.0
          %779 = vmatpush1.msra.mxu0 0.0
          %780 = vmatprep.subr.mxu0 0.0
          %781 = vmatpush1.msra.mxu0 0.0
          %782 = vmatprep.subr.mxu0 0.0
          %783 = vmatpush1.msra.mxu0 0.0
          %784 = vmatprep.subr.mxu0 0.0
          %785 = vmatpush1.msra.mxu0 0.0
          %786 = vmatprep.subr.mxu0 0.0
          %787 = vmatpush1.msra.mxu0 0.0
          %788 = vmatprep.subr.mxu0 0.0
          %789 = vmatpush1.msra.mxu0 0.0
          %790 = vmatprep.subr.mxu0 0.0
          %791 = vmatpush1.msra.mxu0 0.0
          %792 = vmatprep.subr.mxu0 0.0
          %793 = vmatpush1.msra.mxu0 0.0
          %794 = vmatprep.subr.mxu0 0.0
          %795 = vmatpush1.msra.mxu0 0.0
          %796 = vmatprep.subr.mxu0 0.0
          %797 = vmatpush1.msra.mxu0 0.0
          %798 = vmatprep.mubr.f32.mxu0 0.0
          %799 = vmatmul.mubr.f32.gmra.mrb[0].mxu0 %v656
          %v800 = vpop.f32.mrb[0].mxu0
          %v801 = vadd.f32 0.0, %v800
          %v802 = vpop.f32.mrb[0].mxu0
          %803 = vmatprep.mubr.f32.mxu0 0.0
          %804 = vmatmul.mubr.f32.gmra.mrb[0].mxu0 %v659
          %v805 = vpop.f32.mrb[0].mxu0
          %v806 = vadd.f32 0.0, %v805
          %v807 = vpop.f32.mrb[0].mxu0
          %808 = vmatprep.mubr.f32.mxu0 0.0
          %809 = vmatmul.mubr.f32.gmra.mrb[0].mxu0 %v664
          %v810 = vpop.f32.mrb[0].mxu0
          %v811 = vadd.f32 0.0, %v810
          %v812 = vpop.f32.mrb[0].mxu0
          %813 = vmatprep.mubr.f32.mxu0 0.0
          %814 = vmatmul.mubr.f32.gmra.mrb[0].mxu0 %v667
          %v815 = vpop.f32.mrb[0].mxu0
          %v816 = vadd.f32 0.0, %v815
          %v817 = vpop.f32.mrb[0].mxu0
          %818 = vmatprep.mubr.f32.mxu0 0.0
          %819 = vmatmul.mubr.f32.gmra.mrb[0].mxu0 %v672
          %v820 = vpop.f32.mrb[0].mxu0
          %v821 = vadd.f32 0.0, %v820
          %v822 = vpop.f32.mrb[0].mxu0
          %823 = vmatprep.mubr.f32.mxu0 0.0
          %824 = vmatmul.mubr.f32.gmra.mrb[0].mxu0 %v675
          %v825 = vpop.f32.mrb[0].mxu0
          %v826 = vadd.f32 0.0, %v825
          %v827 = vpop.f32.mrb[0].mxu0
          %828 = vmatprep.mubr.f32.mxu0 0.0
          %829 = vmatmul.mubr.f32.gmra.mrb[0].mxu0 %v680
          %v830 = vpop.f32.mrb[0].mxu0
          %v831 = vadd.f32 0.0, %v830
          %v832 = vpop.f32.mrb[0].mxu0
          %833 = vmatprep.mubr.f32.mxu0 0.0
          %834 = vmatmul.mubr.f32.gmra.mrb[0].mxu0 %v683
          %v835 = vpop.f32.mrb[0].mxu0
          %v836 = vadd.f32 0.0, %v835
          %v837 = vpop.f32.mrb[0].mxu0
          %838 = vmatprep.mubr.f32.mxu0 0.0
          %839 = vmatmul.mubr.f32.gmra.mrb[0].mxu0 %v688
          %v840 = vpop.f32.mrb[0].mxu0
          %v841 = vadd.f32 0.0, %v840
          %v842 = vpop.f32.mrb[0].mxu0
          %843 = vmatprep.mubr.f32.mxu0 0.0
          %844 = vmatmul.mubr.f32.gmra.mrb[0].mxu0 %v691
          %v845 = vpop.f32.mrb[0].mxu0
          %v846 = vadd.f32 0.0, %v845
          %v847 = vpop.f32.mrb[0].mxu0
          %848 = vmatprep.mubr.f32.mxu0 0.0
          %849 = vmatmul.mubr.f32.gmra.mrb[0].mxu0 %v696
          %v850 = vpop.f32.mrb[0].mxu0
          %v851 = vadd.f32 0.0, %v850
          %v852 = vpop.f32.mrb[0].mxu0
          %853 = vmatprep.mubr.f32.mxu0 0.0
          %854 = vmatmul.mubr.f32.gmra.mrb[0].mxu0 %v699
          %v855 = vpop.f32.mrb[0].mxu0
          %v856 = vadd.f32 0.0, %v855
          %v857 = vpop.f32.mrb[0].mxu0
          %858 = vmatprep.mubr.f32.mxu0 0.0
          %859 = vmatmul.mubr.f32.gmra.mrb[0].mxu0 %v704
          %v860 = vpop.f32.mrb[0].mxu0
          %v861 = vadd.f32 0.0, %v860
          %v862 = vpop.f32.mrb[0].mxu0
          %863 = vmatprep.mubr.f32.mxu0 0.0
          %864 = vmatmul.mubr.f32.gmra.mrb[0].mxu0 %v707
          %v865 = vpop.f32.mrb[0].mxu0
          %v866 = vadd.f32 0.0, %v865
          %v867 = vpop.f32.mrb[0].mxu0
          %868 = vmatprep.mubr.f32.mxu0 0.0
          %869 = vmatmul.mubr.f32.gmra.mrb[0].mxu0 %v712
          %v870 = vpop.f32.mrb[0].mxu0
          %v871 = vadd.f32 0.0, %v870
          %v872 = vpop.f32.mrb[0].mxu0
          %873 = vmatprep.mubr.f32.mxu0 0.0
          %874 = vmatmul.mubr.f32.gmra.mrb[0].mxu0 %v715
          %v875 = vpop.f32.mrb[0].mxu0
          %v876 = vadd.f32 0.0, %v875
          %v877 = vpop.f32.mrb[0].mxu0
          %878 = vdwg.mxu0
          %s879 = scalar_lea.vmem [#allocation2], %s498
          %880 = vst [vmem:[%s879] sm:$0xff] %v801
          %881 = vst [vmem:[%s879 + $0x8] sm:$0xff] %v806
          %882 = vst [vmem:[%s879 + $0x10] sm:$0xff] %v811
          %883 = vst [vmem:[%s879 + $0x18] sm:$0xff] %v816
          %884 = vst [vmem:[%s879 + $0x20] sm:$0xff] %v821
          %885 = vst [vmem:[%s879 + $0x28] sm:$0xff] %v826
          %886 = vst [vmem:[%s879 + $0x30] sm:$0xff] %v831
          %887 = vst [vmem:[%s879 + $0x38] sm:$0xff] %v836
          %888 = vst [vmem:[%s879 + $0x40] sm:$0xff] %v841
          %889 = vst [vmem:[%s879 + $0x48] sm:$0xff] %v846
          %890 = vst [vmem:[%s879 + $0x50] sm:$0xff] %v851
          %891 = vst [vmem:[%s879 + $0x58] sm:$0xff] %v856
          %892 = vst [vmem:[%s879 + $0x60] sm:$0xff] %v861
          %893 = vst [vmem:[%s879 + $0x68] sm:$0xff] %v866
          %894 = vst [vmem:[%s879 + $0x70] sm:$0xff] %v871
          %895 = vst [vmem:[%s879 + $0x78] sm:$0xff] %v876
          %v896 = vld [vmem:[#allocation4] sm:$0x1]
          %v897 = vadd.f32 %v801, %v806
          %v898 = vadd.f32 %v897, %v811
          %v899 = vadd.f32 %v898, %v816
          %v900 = vadd.f32 %v899, %v821
          %v901 = vadd.f32 %v900, %v826
          %v902 = vadd.f32 %v901, %v831
          %v903 = vadd.f32 %v902, %v836
          %v904 = vadd.f32 %v903, %v841
          %v905 = vadd.f32 %v904, %v846
          %v906 = vadd.f32 %v905, %v851
          %v907 = vadd.f32 %v906, %v856
          %v908 = vadd.f32 %v907, %v861
          %v909 = vadd.f32 %v908, %v866
          %v910 = vadd.f32 %v909, %v871
          %v911 = vadd.f32 %v910, %v876
          %v912 = vrot.slane %v911, 4
          %v913 = vadd.f32 %v911, %v912
          %v914 = vrot.slane %v913, 2
          %v915 = vadd.f32 %v913, %v914
          %v916 = vrot.slane %v915, 1
          %v917 = vadd.f32 %v915, %v916
          %v918 = vadd.f32 %v896, %v917
          %919 = vst [vmem:[#allocation4] sm:$0x1] %v918
          %v920 = vld [vmem:[#allocation4 + $0x1] sm:$0x1]
          %v921 = vmul.f32 %v801, %v801
          %v922 = vmul.f32 %v806, %v806
          %v923 = vmul.f32 %v811, %v811
          %v924 = vmul.f32 %v816, %v816
          %v925 = vmul.f32 %v821, %v821
          %v926 = vmul.f32 %v826, %v826
          %v927 = vmul.f32 %v831, %v831
          %v928 = vmul.f32 %v836, %v836
          %v929 = vmul.f32 %v841, %v841
          %v930 = vmul.f32 %v846, %v846
          %v931 = vmul.f32 %v851, %v851
          %v932 = vmul.f32 %v856, %v856
          %v933 = vmul.f32 %v861, %v861
          %v934 = vmul.f32 %v866, %v866
          %v935 = vmul.f32 %v871, %v871
          %v936 = vmul.f32 %v876, %v876
          %v937 = vadd.f32 %v921, %v922
          %v938 = vadd.f32 %v937, %v923
          %v939 = vadd.f32 %v938, %v924
          %v940 = vadd.f32 %v939, %v925
          %v941 = vadd.f32 %v940, %v926
          %v942 = vadd.f32 %v941, %v927
          %v943 = vadd.f32 %v942, %v928
          %v944 = vadd.f32 %v943, %v929
          %v945 = vadd.f32 %v944, %v930
          %v946 = vadd.f32 %v945, %v931
          %v947 = vadd.f32 %v946, %v932
          %v948 = vadd.f32 %v947, %v933
          %v949 = vadd.f32 %v948, %v934
          %v950 = vadd.f32 %v949, %v935
          %v951 = vadd.f32 %v950, %v936
          %v952 = vrot.slane %v951, 4
          %v953 = vadd.f32 %v951, %v952
          %v954 = vrot.slane %v953, 2
          %v955 = vadd.f32 %v953, %v954
          %v956 = vrot.slane %v955, 1
          %v957 = vadd.f32 %v955, %v956
          %v958 = vadd.f32 %v920, %v957
          %959 = vst [vmem:[#allocation4 + $0x1] sm:$0x1] %v958
        $region88: #{tpu_custom_call.1} parent=59 // pred_fallthru
          _
        %p960 = scmp.eq.s32.totalorder %s34, 1
        // Predicated region
        $region89: #{tpu_custom_call.1} parent=59 // pred_check
          %p961 = pneg %p960
        $region90: #{tpu_custom_call.1} parent=59 // pred_check_branch
          %963 = sbr.rel (%p961) target = $region92
        $region91: #{tpu_custom_call.1} parent=59 // pred_region
          // Predicated region
          $region93: #{tpu_custom_call.1} parent=91 // pred_check
            %p964 = pneg %p500
          $region94: #{tpu_custom_call.1} parent=91 // pred_check_branch
            %966 = sbr.rel (%p964) target = $region96
          $region95: #{tpu_custom_call.1} parent=91 // pred_region
            %v967 = vld [vmem:[#allocation4] sm:$0x1]
            %v968 = vmul.f32 %v967, 0.01
            %v969 = vld [vmem:[#allocation4 + $0x1] sm:$0x1]
            %v970 = vmul.f32 %v969, 0.01
            %v971 = vmul.f32 %v968, %v968
            %v972 = vsub.f32 %v970, %v971
            %v973 = vld [vmem:[%s6] sm:$0x1]
            %v974 = vadd.f32 %v972, 1e-05
            %v975 = vrsqrt.pop %v974
            %v976 = vmul.f32 %v973, %v975
            %977 = vst [vmem:[#allocation6] sm:$0x1] %v976
            %v978 = vld [vmem:[%s7] sm:$0x1]
            %v979 = vmul.f32 %v968, %v976
            %v980 = vsub.f32 %v978, %v979
            %981 = vst [vmem:[#allocation6 + $0x1] sm:$0x1] %v980
          $region96: #{tpu_custom_call.1} parent=91 // pred_fallthru
            _
          %s982 = scalar_lea.vmem [#allocation2], %s498
          %v983 = vld [vmem:[%s982] sm:$0xff]
          %v984 = vld [vmem:[%s982 + $0x8] sm:$0xff]
          %v985 = vld [vmem:[%s982 + $0x10] sm:$0xff]
          %v986 = vld [vmem:[%s982 + $0x18] sm:$0xff]
          %v987 = vld [vmem:[%s982 + $0x20] sm:$0xff]
          %v988 = vld [vmem:[%s982 + $0x28] sm:$0xff]
          %v989 = vld [vmem:[%s982 + $0x30] sm:$0xff]
          %v990 = vld [vmem:[%s982 + $0x38] sm:$0xff]
          %v991 = vld [vmem:[%s982 + $0x40] sm:$0xff]
          %v992 = vld [vmem:[%s982 + $0x48] sm:$0xff]
          %v993 = vld [vmem:[%s982 + $0x50] sm:$0xff]
          %v994 = vld [vmem:[%s982 + $0x58] sm:$0xff]
          %v995 = vld [vmem:[%s982 + $0x60] sm:$0xff]
          %v996 = vld [vmem:[%s982 + $0x68] sm:$0xff]
          %v997 = vld [vmem:[%s982 + $0x70] sm:$0xff]
          %v998 = vld [vmem:[%s982 + $0x78] sm:$0xff]
          %v999 = vld [vmem:[#allocation6] sm:$0x1]
          %v1000 = vlaneseq
          %v1001 = vshrl.u32 %v1000, 7
          %v1002 = vsub.s32 0, %v1001
          %v1003 = vrot.slane %v999, %v1002
          %v1004 = vmul.f32 %v983, %v1003
          %v1005 = vmul.f32 %v984, %v1003
          %v1006 = vmul.f32 %v985, %v1003
          %v1007 = vmul.f32 %v986, %v1003
          %v1008 = vmul.f32 %v987, %v1003
          %v1009 = vmul.f32 %v988, %v1003
          %v1010 = vmul.f32 %v989, %v1003
          %v1011 = vmul.f32 %v990, %v1003
          %v1012 = vmul.f32 %v991, %v1003
          %v1013 = vmul.f32 %v992, %v1003
          %v1014 = vmul.f32 %v993, %v1003
          %v1015 = vmul.f32 %v994, %v1003
          %v1016 = vmul.f32 %v995, %v1003
          %v1017 = vmul.f32 %v996, %v1003
          %v1018 = vmul.f32 %v997, %v1003
          %v1019 = vmul.f32 %v998, %v1003
          %v1020 = vld [vmem:[#allocation6 + $0x1] sm:$0x1]
          %v1021 = vlaneseq
          %v1022 = vshrl.u32 %v1021, 7
          %v1023 = vsub.s32 0, %v1022
          %v1024 = vrot.slane %v1020, %v1023
          %v1025 = vadd.f32 %v1004, %v1024
          %v1026 = vadd.f32 %v1005, %v1024
          %v1027 = vadd.f32 %v1006, %v1024
          %v1028 = vadd.f32 %v1007, %v1024
          %v1029 = vadd.f32 %v1008, %v1024
          %v1030 = vadd.f32 %v1009, %v1024
          %v1031 = vadd.f32 %v1010, %v1024
          %v1032 = vadd.f32 %v1011, %v1024
          %v1033 = vadd.f32 %v1012, %v1024
          %v1034 = vadd.f32 %v1013, %v1024
          %v1035 = vadd.f32 %v1014, %v1024
          %v1036 = vadd.f32 %v1015, %v1024
          %v1037 = vadd.f32 %v1016, %v1024
          %v1038 = vadd.f32 %v1017, %v1024
          %v1039 = vadd.f32 %v1018, %v1024
          %v1040 = vadd.f32 %v1019, %v1024
          %v1041 = vmax.f32 %v1025, 0.0
          %v1042 = vmax.f32 %v1026, 0.0
          %v1043 = vmax.f32 %v1027, 0.0
          %v1044 = vmax.f32 %v1028, 0.0
          %v1045 = vmax.f32 %v1029, 0.0
          %v1046 = vmax.f32 %v1030, 0.0
          %v1047 = vmax.f32 %v1031, 0.0
          %v1048 = vmax.f32 %v1032, 0.0
          %v1049 = vmax.f32 %v1033, 0.0
          %v1050 = vmax.f32 %v1034, 0.0
          %v1051 = vmax.f32 %v1035, 0.0
          %v1052 = vmax.f32 %v1036, 0.0
          %v1053 = vmax.f32 %v1037, 0.0
          %v1054 = vmax.f32 %v1038, 0.0
          %v1055 = vmax.f32 %v1039, 0.0
          %v1056 = vmax.f32 %v1040, 0.0
          %v1057 = vld [vmem:[#allocation16] sm:$0xff]
          %v1058 = vld [vmem:[#allocation16 + $0x8] sm:$0xff]
          %v1059 = vld [vmem:[#allocation16 + $0x10] sm:$0xff]
          %v1060 = vld [vmem:[#allocation16 + $0x18] sm:$0xff]
          %v1061 = vld [vmem:[#allocation16 + $0x20] sm:$0xff]
          %v1062 = vld [vmem:[#allocation16 + $0x28] sm:$0xff]
          %v1063 = vld [vmem:[#allocation16 + $0x30] sm:$0xff]
          %v1064 = vld [vmem:[#allocation16 + $0x38] sm:$0xff]
          %v1065 = vld [vmem:[#allocation16 + $0x40] sm:$0xff]
          %v1066 = vld [vmem:[#allocation16 + $0x48] sm:$0xff]
          %v1067 = vld [vmem:[#allocation16 + $0x50] sm:$0xff]
          %v1068 = vld [vmem:[#allocation16 + $0x58] sm:$0xff]
          %v1069 = vld [vmem:[#allocation16 + $0x60] sm:$0xff]
          %v1070 = vld [vmem:[#allocation16 + $0x68] sm:$0xff]
          %v1071 = vld [vmem:[#allocation16 + $0x70] sm:$0xff]
          %v1072 = vld [vmem:[#allocation16 + $0x78] sm:$0xff]
          %1073 = vmatprep.subr.mxu0 0.0
          %1074 = vmatpush1.msra.mxu0 %v1057
          %1075 = vmatprep.subr.mxu0 0.0
          %1076 = vmatpush1.msra.mxu0 %v1058
          %1077 = vmatprep.subr.mxu0 0.0
          %1078 = vmatpush1.msra.mxu0 %v1059
          %1079 = vmatprep.subr.mxu0 0.0
          %1080 = vmatpush1.msra.mxu0 %v1060
          %1081 = vmatprep.subr.mxu0 0.0
          %1082 = vmatpush1.msra.mxu0 %v1061
          %1083 = vmatprep.subr.mxu0 0.0
          %1084 = vmatpush1.msra.mxu0 %v1062
          %1085 = vmatprep.subr.mxu0 0.0
          %1086 = vmatpush1.msra.mxu0 %v1063
          %1087 = vmatprep.subr.mxu0 0.0
          %1088 = vmatpush1.msra.mxu0 %v1064
          %1089 = vmatprep.subr.mxu0 0.0
          %1090 = vmatpush1.msra.mxu0 %v1065
          %1091 = vmatprep.subr.mxu0 0.0
          %1092 = vmatpush1.msra.mxu0 %v1066
          %1093 = vmatprep.subr.mxu0 0.0
          %1094 = vmatpush1.msra.mxu0 %v1067
          %1095 = vmatprep.subr.mxu0 0.0
          %1096 = vmatpush1.msra.mxu0 %v1068
          %1097 = vmatprep.subr.mxu0 0.0
          %1098 = vmatpush1.msra.mxu0 %v1069
          %1099 = vmatprep.subr.mxu0 0.0
          %1100 = vmatpush1.msra.mxu0 %v1070
          %1101 = vmatprep.subr.mxu0 0.0
          %1102 = vmatpush1.msra.mxu0 %v1071
          %1103 = vmatprep.subr.mxu0 0.0
          %1104 = vmatpush1.msra.mxu0 %v1072
          %1105 = vmatprep.subr.mxu0 0.0
          %1106 = vmatpush1.msra.mxu0 0.0
          %1107 = vmatprep.subr.mxu0 0.0
          %1108 = vmatpush1.msra.mxu0 0.0
          %1109 = vmatprep.subr.mxu0 0.0
          %1110 = vmatpush1.msra.mxu0 0.0
          %1111 = vmatprep.subr.mxu0 0.0
          %1112 = vmatpush1.msra.mxu0 0.0
          %1113 = vmatprep.subr.mxu0 0.0
          %1114 = vmatpush1.msra.mxu0 0.0
          %1115 = vmatprep.subr.mxu0 0.0
          %1116 = vmatpush1.msra.mxu0 0.0
          %1117 = vmatprep.subr.mxu0 0.0
          %1118 = vmatpush1.msra.mxu0 0.0
          %1119 = vmatprep.subr.mxu0 0.0
          %1120 = vmatpush1.msra.mxu0 0.0
          %1121 = vmatprep.subr.mxu0 0.0
          %1122 = vmatpush1.msra.mxu0 0.0
          %1123 = vmatprep.subr.mxu0 0.0
          %1124 = vmatpush1.msra.mxu0 0.0
          %1125 = vmatprep.subr.mxu0 0.0
          %1126 = vmatpush1.msra.mxu0 0.0
          %1127 = vmatprep.subr.mxu0 0.0
          %1128 = vmatpush1.msra.mxu0 0.0
          %1129 = vmatprep.subr.mxu0 0.0
          %1130 = vmatpush1.msra.mxu0 0.0
          %1131 = vmatprep.subr.mxu0 0.0
          %1132 = vmatpush1.msra.mxu0 0.0
          %1133 = vmatprep.subr.mxu0 0.0
          %1134 = vmatpush1.msra.mxu0 0.0
          %1135 = vmatprep.subr.mxu0 0.0
          %1136 = vmatpush1.msra.mxu0 0.0
          %1137 = vmatprep.mubr.f32.mxu0 0.0
          %1138 = vmatmul.mubr.f32.gmra.mrb[0].mxu0 %v1041
          %v1139 = vpop.f32.mrb[0].mxu0
          %v1140 = vadd.f32 0.0, %v1139
          %v1141 = vpop.f32.mrb[0].mxu0
          %1142 = vmatprep.mubr.f32.mxu0 0.0
          %1143 = vmatmul.mubr.f32.gmra.mrb[0].mxu0 %v1042
          %v1144 = vpop.f32.mrb[0].mxu0
          %v1145 = vadd.f32 0.0, %v1144
          %v1146 = vpop.f32.mrb[0].mxu0
          %1147 = vmatprep.mubr.f32.mxu0 0.0
          %1148 = vmatmul.mubr.f32.gmra.mrb[0].mxu0 %v1043
          %v1149 = vpop.f32.mrb[0].mxu0
          %v1150 = vadd.f32 0.0, %v1149
          %v1151 = vpop.f32.mrb[0].mxu0
          %1152 = vmatprep.mubr.f32.mxu0 0.0
          %1153 = vmatmul.mubr.f32.gmra.mrb[0].mxu0 %v1044
          %v1154 = vpop.f32.mrb[0].mxu0
          %v1155 = vadd.f32 0.0, %v1154
          %v1156 = vpop.f32.mrb[0].mxu0
          %1157 = vmatprep.mubr.f32.mxu0 0.0
          %1158 = vmatmul.mubr.f32.gmra.mrb[0].mxu0 %v1045
          %v1159 = vpop.f32.mrb[0].mxu0
          %v1160 = vadd.f32 0.0, %v1159
          %v1161 = vpop.f32.mrb[0].mxu0
          %1162 = vmatprep.mubr.f32.mxu0 0.0
          %1163 = vmatmul.mubr.f32.gmra.mrb[0].mxu0 %v1046
          %v1164 = vpop.f32.mrb[0].mxu0
          %v1165 = vadd.f32 0.0, %v1164
          %v1166 = vpop.f32.mrb[0].mxu0
          %1167 = vmatprep.mubr.f32.mxu0 0.0
          %1168 = vmatmul.mubr.f32.gmra.mrb[0].mxu0 %v1047
          %v1169 = vpop.f32.mrb[0].mxu0
          %v1170 = vadd.f32 0.0, %v1169
          %v1171 = vpop.f32.mrb[0].mxu0
          %1172 = vmatprep.mubr.f32.mxu0 0.0
          %1173 = vmatmul.mubr.f32.gmra.mrb[0].mxu0 %v1048
          %v1174 = vpop.f32.mrb[0].mxu0
          %v1175 = vadd.f32 0.0, %v1174
          %v1176 = vpop.f32.mrb[0].mxu0
          %1177 = vmatprep.mubr.f32.mxu0 0.0
          %1178 = vmatmul.mubr.f32.gmra.mrb[0].mxu0 %v1049
          %v1179 = vpop.f32.mrb[0].mxu0
          %v1180 = vadd.f32 0.0, %v1179
          %v1181 = vpop.f32.mrb[0].mxu0
          %1182 = vmatprep.mubr.f32.mxu0 0.0
          %1183 = vmatmul.mubr.f32.gmra.mrb[0].mxu0 %v1050
          %v1184 = vpop.f32.mrb[0].mxu0
          %v1185 = vadd.f32 0.0, %v1184
          %v1186 = vpop.f32.mrb[0].mxu0
          %1187 = vmatprep.mubr.f32.mxu0 0.0
          %1188 = vmatmul.mubr.f32.gmra.mrb[0].mxu0 %v1051
          %v1189 = vpop.f32.mrb[0].mxu0
          %v1190 = vadd.f32 0.0, %v1189
          %v1191 = vpop.f32.mrb[0].mxu0
          %1192 = vmatprep.mubr.f32.mxu0 0.0
          %1193 = vmatmul.mubr.f32.gmra.mrb[0].mxu0 %v1052
          %v1194 = vpop.f32.mrb[0].mxu0
          %v1195 = vadd.f32 0.0, %v1194
          %v1196 = vpop.f32.mrb[0].mxu0
          %1197 = vmatprep.mubr.f32.mxu0 0.0
          %1198 = vmatmul.mubr.f32.gmra.mrb[0].mxu0 %v1053
          %v1199 = vpop.f32.mrb[0].mxu0
          %v1200 = vadd.f32 0.0, %v1199
          %v1201 = vpop.f32.mrb[0].mxu0
          %1202 = vmatprep.mubr.f32.mxu0 0.0
          %1203 = vmatmul.mubr.f32.gmra.mrb[0].mxu0 %v1054
          %v1204 = vpop.f32.mrb[0].mxu0
          %v1205 = vadd.f32 0.0, %v1204
          %v1206 = vpop.f32.mrb[0].mxu0
          %1207 = vmatprep.mubr.f32.mxu0 0.0
          %1208 = vmatmul.mubr.f32.gmra.mrb[0].mxu0 %v1055
          %v1209 = vpop.f32.mrb[0].mxu0
          %v1210 = vadd.f32 0.0, %v1209
          %v1211 = vpop.f32.mrb[0].mxu0
          %1212 = vmatprep.mubr.f32.mxu0 0.0
          %1213 = vmatmul.mubr.f32.gmra.mrb[0].mxu0 %v1056
          %v1214 = vpop.f32.mrb[0].mxu0
          %v1215 = vadd.f32 0.0, %v1214
          %v1216 = vpop.f32.mrb[0].mxu0
          %1217 = vdwg.mxu0
          %s1218 = scalar_lea.vmem [#allocation3], %s498
          %1219 = vst [vmem:[%s1218] sm:$0xff] %v1140
          %1220 = vst [vmem:[%s1218 + $0x8] sm:$0xff] %v1145
          %1221 = vst [vmem:[%s1218 + $0x10] sm:$0xff] %v1150
          %1222 = vst [vmem:[%s1218 + $0x18] sm:$0xff] %v1155
          %1223 = vst [vmem:[%s1218 + $0x20] sm:$0xff] %v1160
          %1224 = vst [vmem:[%s1218 + $0x28] sm:$0xff] %v1165
          %1225 = vst [vmem:[%s1218 + $0x30] sm:$0xff] %v1170
          %1226 = vst [vmem:[%s1218 + $0x38] sm:$0xff] %v1175
          %1227 = vst [vmem:[%s1218 + $0x40] sm:$0xff] %v1180
          %1228 = vst [vmem:[%s1218 + $0x48] sm:$0xff] %v1185
          %1229 = vst [vmem:[%s1218 + $0x50] sm:$0xff] %v1190
          %1230 = vst [vmem:[%s1218 + $0x58] sm:$0xff] %v1195
          %1231 = vst [vmem:[%s1218 + $0x60] sm:$0xff] %v1200
          %1232 = vst [vmem:[%s1218 + $0x68] sm:$0xff] %v1205
          %1233 = vst [vmem:[%s1218 + $0x70] sm:$0xff] %v1210
          %1234 = vst [vmem:[%s1218 + $0x78] sm:$0xff] %v1215
          %p1235 = scmp.ne.s32.totalorder %s35, 0
          // Predicated region
          $region97: #{tpu_custom_call.1} parent=91 // pred_check
            %p1236 = pneg %p1235
          $region98: #{tpu_custom_call.1} parent=91 // pred_check_branch
            %1238 = sbr.rel (%p1236) target = $region100
          $region99: #{tpu_custom_call.1} parent=91 // pred_region
            %v1239 = vld [vmem:[#allocation5] sm:$0x1]
            %v1240 = vadd.f32 %v1140, %v1145
            %v1241 = vadd.f32 %v1240, %v1150
            %v1242 = vadd.f32 %v1241, %v1155
            %v1243 = vadd.f32 %v1242, %v1160
            %v1244 = vadd.f32 %v1243, %v1165
            %v1245 = vadd.f32 %v1244, %v1170
            %v1246 = vadd.f32 %v1245, %v1175
            %v1247 = vadd.f32 %v1246, %v1180
            %v1248 = vadd.f32 %v1247, %v1185
            %v1249 = vadd.f32 %v1248, %v1190
            %v1250 = vadd.f32 %v1249, %v1195
            %v1251 = vadd.f32 %v1250, %v1200
            %v1252 = vadd.f32 %v1251, %v1205
            %v1253 = vadd.f32 %v1252, %v1210
            %v1254 = vadd.f32 %v1253, %v1215
            %v1255 = vrot.slane %v1254, 4
            %v1256 = vadd.f32 %v1254, %v1255
            %v1257 = vrot.slane %v1256, 2
            %v1258 = vadd.f32 %v1256, %v1257
            %v1259 = vrot.slane %v1258, 1
            %v1260 = vadd.f32 %v1258, %v1259
            %v1261 = vadd.f32 %v1239, %v1260
            %1262 = vst [vmem:[#allocation5] sm:$0x1] %v1261
            %v1263 = vld [vmem:[#allocation5 + $0x1] sm:$0x1]
            %v1264 = vmul.f32 %v1140, %v1140
            %v1265 = vmul.f32 %v1145, %v1145
            %v1266 = vmul.f32 %v1150, %v1150
            %v1267 = vmul.f32 %v1155, %v1155
            %v1268 = vmul.f32 %v1160, %v1160
            %v1269 = vmul.f32 %v1165, %v1165
            %v1270 = vmul.f32 %v1170, %v1170
            %v1271 = vmul.f32 %v1175, %v1175
            %v1272 = vmul.f32 %v1180, %v1180
            %v1273 = vmul.f32 %v1185, %v1185
            %v1274 = vmul.f32 %v1190, %v1190
            %v1275 = vmul.f32 %v1195, %v1195
            %v1276 = vmul.f32 %v1200, %v1200
            %v1277 = vmul.f32 %v1205, %v1205
            %v1278 = vmul.f32 %v1210, %v1210
            %v1279 = vmul.f32 %v1215, %v1215
            %v1280 = vadd.f32 %v1264, %v1265
            %v1281 = vadd.f32 %v1280, %v1266
            %v1282 = vadd.f32 %v1281, %v1267
            %v1283 = vadd.f32 %v1282, %v1268
            %v1284 = vadd.f32 %v1283, %v1269
            %v1285 = vadd.f32 %v1284, %v1270
            %v1286 = vadd.f32 %v1285, %v1271
            %v1287 = vadd.f32 %v1286, %v1272
            %v1288 = vadd.f32 %v1287, %v1273
            %v1289 = vadd.f32 %v1288, %v1274
            %v1290 = vadd.f32 %v1289, %v1275
            %v1291 = vadd.f32 %v1290, %v1276
            %v1292 = vadd.f32 %v1291, %v1277
            %v1293 = vadd.f32 %v1292, %v1278
            %v1294 = vadd.f32 %v1293, %v1279
            %v1295 = vrot.slane %v1294, 4
            %v1296 = vadd.f32 %v1294, %v1295
            %v1297 = vrot.slane %v1296, 2
            %v1298 = vadd.f32 %v1296, %v1297
            %v1299 = vrot.slane %v1298, 1
            %v1300 = vadd.f32 %v1298, %v1299
            %v1301 = vadd.f32 %v1263, %v1300
            %1302 = vst [vmem:[#allocation5 + $0x1] sm:$0x1] %v1301
          $region100: #{tpu_custom_call.1} parent=91 // pred_fallthru
            _
          // Predicated region
          $region101: #{tpu_custom_call.1} parent=91 // pred_check
            %p1303 = pneg %p500
          $region102: #{tpu_custom_call.1} parent=91 // pred_check_branch
            %1305 = sbr.rel (%p1303) target = $region104
          $region103: #{tpu_custom_call.1} parent=91 // pred_region
            %v1306 = vlaneseq
            %v1307 = vshrl.u32 %v1306, 7
            %v1308 = vadd.s32 %v1307, 8
            %v1309 = vadd.s32 %v1307, 16
            %v1310 = vadd.s32 %v1307, 24
            %v1311 = vadd.s32 %v1307, 32
            %v1312 = vadd.s32 %v1307, 40
            %v1313 = vadd.s32 %v1307, 48
            %v1314 = vadd.s32 %v1307, 56
            %v1315 = vadd.s32 %v1307, 64
            %v1316 = vadd.s32 %v1307, 72
            %v1317 = vadd.s32 %v1307, 80
            %v1318 = vadd.s32 %v1307, 88
            %v1319 = vadd.s32 %v1307, 96
            %v1320 = vadd.s32 %v1307, 104
            %v1321 = vadd.s32 %v1307, 112
            %v1322 = vadd.s32 %v1307, 120
            %vm1323 = vcmp.lt.s32.totalorder %v1307, 100
            %vm1324 = vcmp.lt.s32.totalorder %v1308, 100
            %vm1325 = vcmp.lt.s32.totalorder %v1309, 100
            %vm1326 = vcmp.lt.s32.totalorder %v1310, 100
            %vm1327 = vcmp.lt.s32.totalorder %v1311, 100
            %vm1328 = vcmp.lt.s32.totalorder %v1312, 100
            %vm1329 = vcmp.lt.s32.totalorder %v1313, 100
            %vm1330 = vcmp.lt.s32.totalorder %v1314, 100
            %vm1331 = vcmp.lt.s32.totalorder %v1315, 100
            %vm1332 = vcmp.lt.s32.totalorder %v1316, 100
            %vm1333 = vcmp.lt.s32.totalorder %v1317, 100
            %vm1334 = vcmp.lt.s32.totalorder %v1318, 100
            %vm1335 = vcmp.lt.s32.totalorder %v1319, 100
            %vm1336 = vcmp.lt.s32.totalorder %v1320, 100
            %vm1337 = vcmp.lt.s32.totalorder %v1321, 100
            %vm1338 = vcmp.lt.s32.totalorder %v1322, 100
            %v1339 = vsel %vm1323, 1, 0
            %v1340 = vsel %vm1324, 1, 0
            %v1341 = vsel %vm1325, 1, 0
            %v1342 = vsel %vm1326, 1, 0
            %v1343 = vsel %vm1327, 1, 0
            %v1344 = vsel %vm1328, 1, 0
            %v1345 = vsel %vm1329, 1, 0
            %v1346 = vsel %vm1330, 1, 0
            %v1347 = vsel %vm1331, 1, 0
            %v1348 = vsel %vm1332, 1, 0
            %v1349 = vsel %vm1333, 1, 0
            %v1350 = vsel %vm1334, 1, 0
            %v1351 = vsel %vm1335, 1, 0
            %v1352 = vsel %vm1336, 1, 0
            %v1353 = vsel %vm1337, 1, 0
            %v1354 = vsel %vm1338, 1, 0
            %vm1355 = vcmp.eq.s32.totalorder %v1339, 1
            %vm1356 = vcmp.eq.s32.totalorder %v1340, 1
            %vm1357 = vcmp.eq.s32.totalorder %v1341, 1
            %vm1358 = vcmp.eq.s32.totalorder %v1342, 1
            %vm1359 = vcmp.eq.s32.totalorder %v1343, 1
            %vm1360 = vcmp.eq.s32.totalorder %v1344, 1
            %vm1361 = vcmp.eq.s32.totalorder %v1345, 1
            %vm1362 = vcmp.eq.s32.totalorder %v1346, 1
            %vm1363 = vcmp.eq.s32.totalorder %v1347, 1
            %vm1364 = vcmp.eq.s32.totalorder %v1348, 1
            %vm1365 = vcmp.eq.s32.totalorder %v1349, 1
            %vm1366 = vcmp.eq.s32.totalorder %v1350, 1
            %vm1367 = vcmp.eq.s32.totalorder %v1351, 1
            %vm1368 = vcmp.eq.s32.totalorder %v1352, 1
            %vm1369 = vcmp.eq.s32.totalorder %v1353, 1
            %vm1370 = vcmp.eq.s32.totalorder %v1354, 1
            %v1371 = vsel %vm1355, %v1140, 0.0
            %v1372 = vsel %vm1356, %v1145, 0.0
            %v1373 = vsel %vm1357, %v1150, 0.0
            %v1374 = vsel %vm1358, %v1155, 0.0
            %v1375 = vsel %vm1359, %v1160, 0.0
            %v1376 = vsel %vm1360, %v1165, 0.0
            %v1377 = vsel %vm1361, %v1170, 0.0
            %v1378 = vsel %vm1362, %v1175, 0.0
            %v1379 = vsel %vm1363, %v1180, 0.0
            %v1380 = vsel %vm1364, %v1185, 0.0
            %v1381 = vsel %vm1365, %v1190, 0.0
            %v1382 = vsel %vm1366, %v1195, 0.0
            %v1383 = vsel %vm1367, %v1200, 0.0
            %v1384 = vsel %vm1368, %v1205, 0.0
            %v1385 = vsel %vm1369, %v1210, 0.0
            %v1386 = vsel %vm1370, %v1215, 0.0
            %v1387 = vld [vmem:[#allocation5] sm:$0x1]
            %v1388 = vadd.f32 %v1371, %v1372
            %v1389 = vadd.f32 %v1388, %v1373
            %v1390 = vadd.f32 %v1389, %v1374
            %v1391 = vadd.f32 %v1390, %v1375
            %v1392 = vadd.f32 %v1391, %v1376
            %v1393 = vadd.f32 %v1392, %v1377
            %v1394 = vadd.f32 %v1393, %v1378
            %v1395 = vadd.f32 %v1394, %v1379
            %v1396 = vadd.f32 %v1395, %v1380
            %v1397 = vadd.f32 %v1396, %v1381
            %v1398 = vadd.f32 %v1397, %v1382
            %v1399 = vadd.f32 %v1398, %v1383
            %v1400 = vadd.f32 %v1399, %v1384
            %v1401 = vadd.f32 %v1400, %v1385
            %v1402 = vadd.f32 %v1401, %v1386
            %v1403 = vrot.slane %v1402, 4
            %v1404 = vadd.f32 %v1402, %v1403
            %v1405 = vrot.slane %v1404, 2
            %v1406 = vadd.f32 %v1404, %v1405
            %v1407 = vrot.slane %v1406, 1
            %v1408 = vadd.f32 %v1406, %v1407
            %v1409 = vadd.f32 %v1387, %v1408
            %1410 = vst [vmem:[#allocation5] sm:$0x1] %v1409
            %v1411 = vld [vmem:[#allocation5 + $0x1] sm:$0x1]
            %v1412 = vmul.f32 %v1371, %v1371
            %v1413 = vmul.f32 %v1372, %v1372
            %v1414 = vmul.f32 %v1373, %v1373
            %v1415 = vmul.f32 %v1374, %v1374
            %v1416 = vmul.f32 %v1375, %v1375
            %v1417 = vmul.f32 %v1376, %v1376
            %v1418 = vmul.f32 %v1377, %v1377
            %v1419 = vmul.f32 %v1378, %v1378
            %v1420 = vmul.f32 %v1379, %v1379
            %v1421 = vmul.f32 %v1380, %v1380
            %v1422 = vmul.f32 %v1381, %v1381
            %v1423 = vmul.f32 %v1382, %v1382
            %v1424 = vmul.f32 %v1383, %v1383
            %v1425 = vmul.f32 %v1384, %v1384
            %v1426 = vmul.f32 %v1385, %v1385
            %v1427 = vmul.f32 %v1386, %v1386
            %v1428 = vadd.f32 %v1412, %v1413
            %v1429 = vadd.f32 %v1428, %v1414
            %v1430 = vadd.f32 %v1429, %v1415
            %v1431 = vadd.f32 %v1430, %v1416
            %v1432 = vadd.f32 %v1431, %v1417
            %v1433 = vadd.f32 %v1432, %v1418
            %v1434 = vadd.f32 %v1433, %v1419
            %v1435 = vadd.f32 %v1434, %v1420
            %v1436 = vadd.f32 %v1435, %v1421
            %v1437 = vadd.f32 %v1436, %v1422
            %v1438 = vadd.f32 %v1437, %v1423
            %v1439 = vadd.f32 %v1438, %v1424
            %v1440 = vadd.f32 %v1439, %v1425
            %v1441 = vadd.f32 %v1440, %v1426
            %v1442 = vadd.f32 %v1441, %v1427
            %v1443 = vrot.slane %v1442, 4
            %v1444 = vadd.f32 %v1442, %v1443
            %v1445 = vrot.slane %v1444, 2
            %v1446 = vadd.f32 %v1444, %v1445
            %v1447 = vrot.slane %v1446, 1
            %v1448 = vadd.f32 %v1446, %v1447
            %v1449 = vadd.f32 %v1411, %v1448
            %1450 = vst [vmem:[#allocation5 + $0x1] sm:$0x1] %v1449
          $region104: #{tpu_custom_call.1} parent=91 // pred_fallthru
            _
        $region92: #{tpu_custom_call.1} parent=59 // pred_fallthru
          _
        %p1451 = scmp.eq.s32.totalorder %s34, 2
        // Predicated region
        $region105: #{tpu_custom_call.1} parent=59 // pred_check
          %p1452 = pneg %p1451
        $region106: #{tpu_custom_call.1} parent=59 // pred_check_branch
          %1454 = sbr.rel (%p1452) target = $region108
        $region107: #{tpu_custom_call.1} parent=59 // pred_region
          // Predicated region
          $region109: #{tpu_custom_call.1} parent=107 // pred_check
            %p1455 = pneg %p500
          $region110: #{tpu_custom_call.1} parent=107 // pred_check_branch
            %1457 = sbr.rel (%p1455) target = $region112
          $region111: #{tpu_custom_call.1} parent=107 // pred_region
            %v1458 = vld [vmem:[#allocation5] sm:$0x1]
            %v1459 = vmul.f32 %v1458, 0.01
            %v1460 = vld [vmem:[#allocation5 + $0x1] sm:$0x1]
            %v1461 = vmul.f32 %v1460, 0.01
            %v1462 = vmul.f32 %v1459, %v1459
            %v1463 = vsub.f32 %v1461, %v1462
            %v1464 = vld [vmem:[%s8] sm:$0x1]
            %v1465 = vadd.f32 %v1463, 1e-05
            %v1466 = vrsqrt.pop %v1465
            %v1467 = vmul.f32 %v1464, %v1466
            %1468 = vst [vmem:[#allocation7] sm:$0x1] %v1467
            %v1469 = vld [vmem:[%s9] sm:$0x1]
            %v1470 = vmul.f32 %v1459, %v1467
            %v1471 = vsub.f32 %v1469, %v1470
            %1472 = vst [vmem:[#allocation7 + $0x1] sm:$0x1] %v1471
          $region112: #{tpu_custom_call.1} parent=107 // pred_fallthru
            _
          %s1473 = scalar_lea.vmem [#allocation3], %s498
          %v1474 = vld [vmem:[%s1473] sm:$0xff]
          %v1475 = vld [vmem:[%s1473 + $0x8] sm:$0xff]
          %v1476 = vld [vmem:[%s1473 + $0x10] sm:$0xff]
          %v1477 = vld [vmem:[%s1473 + $0x18] sm:$0xff]
          %v1478 = vld [vmem:[%s1473 + $0x20] sm:$0xff]
          %v1479 = vld [vmem:[%s1473 + $0x28] sm:$0xff]
          %v1480 = vld [vmem:[%s1473 + $0x30] sm:$0xff]
          %v1481 = vld [vmem:[%s1473 + $0x38] sm:$0xff]
          %v1482 = vld [vmem:[%s1473 + $0x40] sm:$0xff]
          %v1483 = vld [vmem:[%s1473 + $0x48] sm:$0xff]
          %v1484 = vld [vmem:[%s1473 + $0x50] sm:$0xff]
          %v1485 = vld [vmem:[%s1473 + $0x58] sm:$0xff]
          %v1486 = vld [vmem:[%s1473 + $0x60] sm:$0xff]
          %v1487 = vld [vmem:[%s1473 + $0x68] sm:$0xff]
          %v1488 = vld [vmem:[%s1473 + $0x70] sm:$0xff]
          %v1489 = vld [vmem:[%s1473 + $0x78] sm:$0xff]
          %v1490 = vld [vmem:[#allocation7] sm:$0x1]
          %v1491 = vlaneseq
          %v1492 = vshrl.u32 %v1491, 7
          %v1493 = vsub.s32 0, %v1492
          %v1494 = vrot.slane %v1490, %v1493
          %v1495 = vmul.f32 %v1474, %v1494
          %v1496 = vmul.f32 %v1475, %v1494
          %v1497 = vmul.f32 %v1476, %v1494
          %v1498 = vmul.f32 %v1477, %v1494
          %v1499 = vmul.f32 %v1478, %v1494
          %v1500 = vmul.f32 %v1479, %v1494
          %v1501 = vmul.f32 %v1480, %v1494
          %v1502 = vmul.f32 %v1481, %v1494
          %v1503 = vmul.f32 %v1482, %v1494
          %v1504 = vmul.f32 %v1483, %v1494
          %v1505 = vmul.f32 %v1484, %v1494
          %v1506 = vmul.f32 %v1485, %v1494
          %v1507 = vmul.f32 %v1486, %v1494
          %v1508 = vmul.f32 %v1487, %v1494
          %v1509 = vmul.f32 %v1488, %v1494
          %v1510 = vmul.f32 %v1489, %v1494
          %v1511 = vld [vmem:[#allocation7 + $0x1] sm:$0x1]
          %v1512 = vlaneseq
          %v1513 = vshrl.u32 %v1512, 7
          %v1514 = vsub.s32 0, %v1513
          %v1515 = vrot.slane %v1511, %v1514
          %v1516 = vadd.f32 %v1495, %v1515
          %v1517 = vadd.f32 %v1496, %v1515
          %v1518 = vadd.f32 %v1497, %v1515
          %v1519 = vadd.f32 %v1498, %v1515
          %v1520 = vadd.f32 %v1499, %v1515
          %v1521 = vadd.f32 %v1500, %v1515
          %v1522 = vadd.f32 %v1501, %v1515
          %v1523 = vadd.f32 %v1502, %v1515
          %v1524 = vadd.f32 %v1503, %v1515
          %v1525 = vadd.f32 %v1504, %v1515
          %v1526 = vadd.f32 %v1505, %v1515
          %v1527 = vadd.f32 %v1506, %v1515
          %v1528 = vadd.f32 %v1507, %v1515
          %v1529 = vadd.f32 %v1508, %v1515
          %v1530 = vadd.f32 %v1509, %v1515
          %v1531 = vadd.f32 %v1510, %v1515
          %v1532 = vmax.f32 %v1516, 0.0
          %v1533 = vmax.f32 %v1517, 0.0
          %v1534 = vmax.f32 %v1518, 0.0
          %v1535 = vmax.f32 %v1519, 0.0
          %v1536 = vmax.f32 %v1520, 0.0
          %v1537 = vmax.f32 %v1521, 0.0
          %v1538 = vmax.f32 %v1522, 0.0
          %v1539 = vmax.f32 %v1523, 0.0
          %v1540 = vmax.f32 %v1524, 0.0
          %v1541 = vmax.f32 %v1525, 0.0
          %v1542 = vmax.f32 %v1526, 0.0
          %v1543 = vmax.f32 %v1527, 0.0
          %v1544 = vmax.f32 %v1528, 0.0
          %v1545 = vmax.f32 %v1529, 0.0
          %v1546 = vmax.f32 %v1530, 0.0
          %v1547 = vmax.f32 %v1531, 0.0
          %1548 = vst [vmem:[%s487] sm:$0xff] %v1532
          %1549 = vst [vmem:[%s487 + $0x8] sm:$0xff] %v1533
          %1550 = vst [vmem:[%s487 + $0x10] sm:$0xff] %v1534
          %1551 = vst [vmem:[%s487 + $0x18] sm:$0xff] %v1535
          %1552 = vst [vmem:[%s487 + $0x20] sm:$0xff] %v1536
          %1553 = vst [vmem:[%s487 + $0x28] sm:$0xff] %v1537
          %1554 = vst [vmem:[%s487 + $0x30] sm:$0xff] %v1538
          %1555 = vst [vmem:[%s487 + $0x38] sm:$0xff] %v1539
          %1556 = vst [vmem:[%s487 + $0x40] sm:$0xff] %v1540
          %1557 = vst [vmem:[%s487 + $0x48] sm:$0xff] %v1541
          %1558 = vst [vmem:[%s487 + $0x50] sm:$0xff] %v1542
          %1559 = vst [vmem:[%s487 + $0x58] sm:$0xff] %v1543
          %1560 = vst [vmem:[%s487 + $0x60] sm:$0xff] %v1544
          %1561 = vst [vmem:[%s487 + $0x68] sm:$0xff] %v1545
          %1562 = vst [vmem:[%s487 + $0x70] sm:$0xff] %v1546
          %1563 = vst [vmem:[%s487 + $0x78] sm:$0xff] %v1547
        $region108: #{tpu_custom_call.1} parent=59 // pred_fallthru
          _
        %s1564 = sand.u32 %s282, 1
        %s1565 = scalar_lea.sflag [#allocation11], %s1564
        %s1566 = sand.u32 %s282, 1
        %s1567 = smul.addr %s1566, 128
        %s1568 = scalar_lea.vmem [#allocation18], %s1567
        // Predicated region
        $region113: #{tpu_custom_call.1} parent=59 // pred_check
          %p1569 = pneg %p292
        $region114: #{tpu_custom_call.1} parent=59 // pred_check_branch
          %1571 = sbr.rel (%p1569) target = $region116
        $region115: #{tpu_custom_call.1} parent=59 // pred_region
          %p1572 = scmp.eq.s32.totalorder %s34, 2
          %s1573 = scalar_select %p1572, %s35, 0
          %s1574 = smul.u32 16, %s1573
          %s1576 = ssub.s32 2048, 2048
          %1577 = vsyncadd %s1565, %s1576
          %s1578 = smul.addr %s1574, 128
          %s1579 = scalar_lea.hbm %s10, %s1578
          %s1580 = sshll.u32 %s1568, 4
          %s1581 = int_to_ptr.vmem [resolvable:$true] %s1580
          %1586 = dma.vmem_to_hbm [thread:$0]  %s1581, 2048, %s1579, %s1565, 128, 128, 8
        $region116: #{tpu_custom_call.1} parent=59 // pred_fallthru
          _
      $region60: #{tpu_custom_call.1} parent=5 // pred_fallthru
        _
      %p1587 = scmp.le.s32.totalorder 2, %s25
      // Predicated region
      $region117: #{tpu_custom_call.1} parent=5 // pred_check
        %p1588 = pneg %p1587
      $region118: #{tpu_custom_call.1} parent=5 // pred_check_branch
        %1590 = sbr.rel (%p1588) target = $region120
      $region119: #{tpu_custom_call.1} parent=5 // pred_region
        %s1591 = ssub.s32 %s25, 2
        // Predicated region
        $region121: #{tpu_custom_call.1} parent=119 // pred_check
          %p1592 = pneg %p298
        $region122: #{tpu_custom_call.1} parent=119 // pred_check_branch
          %1594 = sbr.rel (%p1592) target = $region124
        $region123: #{tpu_custom_call.1} parent=119 // pred_region
          %s1595 = sand.u32 %s283, 1
          %s1596 = scalar_lea.sflag [#allocation11], %s1595
          %s1597 = sand.u32 %s283, 1
          %s1598 = smul.addr %s1597, 128
          %s1599 = scalar_lea.vmem [#allocation18], %s1598
          %1600 = dma.done %s1596, 2048
        $region124: #{tpu_custom_call.1} parent=119 // pred_fallthru
          _
      $region120: #{tpu_custom_call.1} parent=5 // pred_fallthru
        _
    $region6: #{tpu_custom_call.1} parent=1 // loop_footer
      %s29 = sadd.s32 1, %s25
    $region7: #{tpu_custom_call.1} parent=1 // loop_footer_branch
      %24 = sbr.rel target = $region3
    $region8: #{tpu_custom_call.1} parent=1 // loop_exit
      _
    %1601 = vsyncpa [#allocation10], 1
    %s1602 = scalar_lea.sflag [#allocation10], 1
    %1603 = vsyncpa %s1602, 1
    %1604 = vsyncpa [#allocation13], 1
    %1605 = vsyncpa [#allocation17], 1
    %1606 = vsyncpa [#allocation11], 1
    %s1607 = scalar_lea.sflag [#allocation11], 1
    %1608 = vsyncpa %s1607, 1

</llo_original>
